<compile_context>
chip_gen: v7x
topology: tpu7x:2x2x1
jax: 0.10.0
libtpu: 0.0.40
codegen_flags: <defaults>
</compile_context>

<pallas_src>
import jax
import jax.numpy as jnp
from jax.experimental import pallas as pl
from jax.experimental.pallas import tpu as pltpu

DATA_DIMENSION = 8   # DATA_DIMENSION from the original script
NUM_LAYERS = 6
HIDDEN = 1
LP = 8               # layers padded to a full sublane tile (rows >= NUM_LAYERS are zero)


def lstm_kernel(x_ref, p_ref, out_ref, gx_ref):
    # x_ref : (bb, T*D)   batch-first input, (time, feature) flattened on lanes
    # p_ref : (LP+4, PC)  packed params (single DMA):
    #           rows 0..LP-1 : cols 0..3  = w_ih  per gate (layers on sublanes,
    #                                         layer-0 row zero)
    #                          cols 4..7  = w_hh  per gate (all layers)
    #                          cols 8..11 = b_ih + b_hh per gate (layer-0 row zero)
    #           rows LP..LP+3: cols 0..D-1 = layer-0 w_ih (gates x D), col D = layer-0 bias
    # out_ref: (1, bb)    top-layer h at t = T-1
    # gx_ref : (T, 4, bb) VMEM scratch, layer-0 gate pre-activations
    T = gx_ref.shape[0]
    bb = gx_ref.shape[2]
    D = x_ref.shape[1] // T
    L = NUM_LAYERS
    S = T + L - 1                                    # wavefront steps
    f32 = jnp.float32

    # ---- one-time parameter unpack (static slices of one small block) ----
    w0 = p_ref[LP:LP + 4, 0:D]                                       # (4, D)
    b0 = jnp.broadcast_to(p_ref[LP:LP + 4, D:D + 1], (4, bb))        # (4, bb)

    def col(c):                                                      # (LP, 1) -> (LP, bb)
        return jnp.broadcast_to(p_ref[0:LP, c:c + 1], (LP, bb))

    wih = [col(g) for g in range(4)]          # input weights, layers >= 1 (row 0 = 0)
    whh = [col(4 + g) for g in range(4)]      # recurrent weights, all layers
    bia = [col(8 + g) for g in range(4)]      # combined bias, layers >= 1 (row 0 = 0)

    layer_idx = jax.lax.broadcasted_iota(jnp.int32, (LP, 1), 0)      # (LP, 1)
    mask0_b = jnp.broadcast_to((layer_idx == 0).astype(f32), (LP, bb))
    zero_row = jnp.zeros((1, bb), f32)

    # ---- fused layer-0 input projection (off the serial chain) ----
    # gx[t] = W_ih0 @ x_t + (b_ih0 + b_hh0);  T independent tiny matmuls.
    # TODO(synk): for very long T, tile T (grid axis / pl.loop) to bound the
    # unrolled code size and the gx scratch.
    for t in range(T):
        x_t = x_ref[:, pl.ds(t * D, D)]                              # (bb, D)
        g4 = jax.lax.dot_general(w0, x_t, (((1,), (1,)), ((), ())),
                                 preferred_element_type=f32)          # (4, bb)
        gx_ref[t] = g4 + b0

    # ---- wavefront recurrence: at step s, layer k processes time t = s-k ----
    def wave_step(s, carry):
        h, c = carry                                                 # (LP, bb) each
        t0 = jnp.minimum(s, T - 1)                                   # clamp; masked below
        gx_t = gx_ref[t0]                                            # (4, bb)

        # input to layer k is h[k-1]; row 0 gets zeros (its real input arrives
        # through the masked gx term), padding rows stay exactly zero.
        inp = jnp.concatenate([zero_row, h[:LP - 1, :]], axis=0)     # (LP, bb)

        def gate(g):
            return (wih[g] * inp + whh[g] * h + bia[g]
                    + mask0_b * gx_t[g:g + 1, :])
        i = jax.nn.sigmoid(gate(0))
        f = jax.nn.sigmoid(gate(1))
        g_ = jnp.tanh(gate(2))
        o = jax.nn.sigmoid(gate(3))
        c_new = f * c + i * g_
        h_new = o * jnp.tanh(c_new)

        # wavefront validity: layer k is active when 0 <= s - k < T
        active = (s >= layer_idx) & ((s - layer_idx) < T)            # (LP, 1)
        h = jnp.where(active, h_new, h)
        c = jnp.where(active, c_new, c)
        return h, c

    h0 = jnp.zeros((LP, bb), f32)
    c0 = jnp.zeros((LP, bb), f32)
    h, _ = jax.lax.fori_loop(0, S, wave_step, (h0, c0),
                             unroll=True if S <= 64 else 8)
    out_ref[...] = h[L - 1:L, :]                     # (1, bb): top-layer h at t = T-1


def init_params(key):
    """PyTorch-style uniform(-1/sqrt(H), 1/sqrt(H)) init, H=1 -> U(-1, 1)."""
    k = 1.0
    params = []
    for l in range(NUM_LAYERS):
        in_sz = DATA_DIMENSION if l == 0 else HIDDEN
        key, k0, k1, k2, k3 = jax.random.split(key, 5)
        w_ih = jax.random.uniform(k0, (4 * HIDDEN, in_sz), jnp.float32, -k, k)
        w_hh = jax.random.uniform(k1, (4 * HIDDEN, HIDDEN), jnp.float32, -k, k)
        b_ih = jax.random.uniform(k2, (4 * HIDDEN,), jnp.float32, -k, k)
        b_hh = jax.random.uniform(k3, (4 * HIDDEN,), jnp.float32, -k, k)
        params.append((w_ih, w_hh, b_ih, b_hh))
    return params


def model04_forward(x, params):
    """x: (B, T, D) batch-first, like the PyTorch module. Returns (B,)."""
    B, T, D = x.shape
    L = NUM_LAYERS
    f32 = jnp.float32

    # ---- pack ALL parameters into one small array (single DMA) ----
    PC = max(12, D + 1)
    zeros4 = jnp.zeros((4,), f32)

    def stack_layers(vals):                              # list -> (LP, 4), zero-padded
        vals = vals + [zeros4] * (LP - len(vals))
        return jnp.stack(vals, axis=0)

    wih_rec = stack_layers([zeros4] + [params[l][0].reshape(4).astype(f32)
                                       for l in range(1, L)])
    whh_rec = stack_layers([params[l][1].reshape(4).astype(f32) for l in range(L)])
    b_rec = stack_layers([zeros4] + [(params[l][2] + params[l][3]).astype(f32)
                                     for l in range(1, L)])
    rec = jnp.concatenate([wih_rec, whh_rec, b_rec], axis=1)            # (LP, 12)
    rec = jnp.pad(rec, ((0, 0), (0, PC - 12)))
    lay0 = jnp.concatenate(
        [params[0][0].astype(f32),                                      # (4, D)
         (params[0][2] + params[0][3]).astype(f32)[:, None]], axis=1)   # (4, D+1)
    lay0 = jnp.pad(lay0, ((0, 0), (0, PC - (D + 1))))
    packed = jnp.concatenate([rec, lay0], axis=0)                       # (LP+4, PC)

    # ---- batch tiling: single block for small B (fewest grid steps on
    # v5e/v6e); 256-wide lane-dense blocks for large B (one block per TC on
    # v7x at B=512); cap at 256 so hoisted broadcasts stay within vregs. ----
    if B <= 256 or (B % 128) != 0:
        bb = B
    elif B % 256 == 0:
        bb = 256
    else:
        bb = 128
    grid = (B // bb,)

    # Free (bitcast) reshape: (B, T, D) -> (B, T*D); no extra HBM traffic.
    x2 = x.astype(f32).reshape(B, T * D)

    # VMEM budget: x block (double-buffered) + gx scratch; raise the scoped
    # limit only when needed (kept under v7x's 64 MiB physical).
    vmem_need = 2 * bb * T * D * 4 + T * 4 * bb * 4 + (2 << 20)
    vlim = None if vmem_need <= (16 << 20) else min(vmem_need, 48 << 20)

    out = pl.pallas_call(
        lstm_kernel,
        out_shape=jax.ShapeDtypeStruct((1, B), f32),
        grid=grid,
        in_specs=[
            pl.BlockSpec((bb, T * D), lambda j: (j, 0)),
            pl.BlockSpec((LP + 4, PC), lambda j: (0, 0)),
        ],
        out_specs=pl.BlockSpec((1, bb), lambda j: (0, j)),
        scratch_shapes=[pltpu.VMEM((T, 4, bb), f32)],
        compiler_params=pltpu.CompilerParams(
            dimension_semantics=("parallel",), vmem_limit_bytes=vlim),
    )(x2, packed)
    return out[0]                                        # (B,) == y[:, -1, 0]


def lstm_ref(x, params):
    """Pure-JAX reference of the PyTorch forward (eval mode)."""
    B, T, D = x.shape
    y = x
    for (w_ih, w_hh, b_ih, b_hh) in params:
        h = jnp.zeros((B, HIDDEN), jnp.float32)
        c = jnp.zeros((B, HIDDEN), jnp.float32)
        outs = []
        for t in range(T):
            gates = y[:, t, :] @ w_ih.T + h @ w_hh.T + b_ih + b_hh
            i = jax.nn.sigmoid(gates[:, 0:1])
            f = jax.nn.sigmoid(gates[:, 1:2])
            g = jnp.tanh(gates[:, 2:3])
            o = jax.nn.sigmoid(gates[:, 3:4])
            c = f * c + i * g
            h = o * jnp.tanh(c)
            outs.append(h)
        y = jnp.stack(outs, axis=1)
    return y[:, -1, 0]


if __name__ == "__main__":
    key = jax.random.PRNGKey(0)
    kx, kp = jax.random.split(key)
    B, T = 2, 8
    x = jax.random.normal(kx, (B, T, DATA_DIMENSION), jnp.float32)
    params = init_params(kp)

    fwd = jax.jit(model04_forward)
    out = fwd(x, params)
    out = jax.block_until_ready(out)

    ref = lstm_ref(x, params)
    assert out.shape == (B,)
    assert jnp.allclose(out, ref, atol=1e-5, rtol=1e-5), (out, ref)
    print("KERNEL_OK")
</pallas_src>

<mosaic_0001>
module attributes {stable_mosaic.version = 11 : i64} {
  func.func @lstm_kernel(%arg0: i32, %arg1: memref<2x64xf32, #tpu.memory_space<vmem>>, %arg2: memref<12x12xf32, #tpu.memory_space<vmem>>, %arg3: memref<1x2xf32, #tpu.memory_space<vmem>>, %arg4: memref<8x4x2xf32, #tpu.memory_space<vmem>>) attributes {dimension_semantics = [#tpu.dimension_semantics<parallel>], iteration_bounds = array<i64: 1>, scalar_prefetch = 0 : i64, scratch_operands = 1 : i64, tpu.core_type = #tpu.core_type<tc>, window_params = [{transform_indices = @transform_0, window_bounds = array<i64: 2, 64>}, {pipeline_mode = #tpu.pipeline_mode<synchronous>, transform_indices = @transform_1, window_bounds = array<i64: 12, 12>}, {transform_indices = @transform_2, window_bounds = array<i64: 1, 2>}]} {
    %c8 = arith.constant 8 : index
    %c0 = arith.constant 0 : index
    %0 = vector.load %arg2[%c8, %c0] : memref<12x12xf32, #tpu.memory_space<vmem>>, vector<4x8xf32>
    %c8_0 = arith.constant 8 : index
    %c8_1 = arith.constant 8 : index
    %1 = vector.load %arg2[%c8_0, %c8_1] : memref<12x12xf32, #tpu.memory_space<vmem>>, vector<4x1xf32>
    %2 = vector.shape_cast %1 : vector<4x1xf32> to vector<4x1xf32>
    %3 = vector.broadcast %2 : vector<4x1xf32> to vector<4x2xf32>
    %c0_2 = arith.constant 0 : index
    %c0_3 = arith.constant 0 : index
    %4 = vector.load %arg2[%c0_2, %c0_3] : memref<12x12xf32, #tpu.memory_space<vmem>>, vector<8x1xf32>
    %5 = vector.shape_cast %4 : vector<8x1xf32> to vector<8x1xf32>
    %6 = vector.broadcast %5 : vector<8x1xf32> to vector<8x2xf32>
    %c0_4 = arith.constant 0 : index
    %c1 = arith.constant 1 : index
    %7 = vector.load %arg2[%c0_4, %c1] : memref<12x12xf32, #tpu.memory_space<vmem>>, vector<8x1xf32>
    %8 = vector.shape_cast %7 : vector<8x1xf32> to vector<8x1xf32>
    %9 = vector.broadcast %8 : vector<8x1xf32> to vector<8x2xf32>
    %c0_5 = arith.constant 0 : index
    %c2 = arith.constant 2 : index
    %10 = vector.load %arg2[%c0_5, %c2] : memref<12x12xf32, #tpu.memory_space<vmem>>, vector<8x1xf32>
    %11 = vector.shape_cast %10 : vector<8x1xf32> to vector<8x1xf32>
    %12 = vector.broadcast %11 : vector<8x1xf32> to vector<8x2xf32>
    %c0_6 = arith.constant 0 : index
    %c3 = arith.constant 3 : index
    %13 = vector.load %arg2[%c0_6, %c3] : memref<12x12xf32, #tpu.memory_space<vmem>>, vector<8x1xf32>
    %14 = vector.shape_cast %13 : vector<8x1xf32> to vector<8x1xf32>
    %15 = vector.broadcast %14 : vector<8x1xf32> to vector<8x2xf32>
    %c0_7 = arith.constant 0 : index
    %c4 = arith.constant 4 : index
    %16 = vector.load %arg2[%c0_7, %c4] : memref<12x12xf32, #tpu.memory_space<vmem>>, vector<8x1xf32>
    %17 = vector.shape_cast %16 : vector<8x1xf32> to vector<8x1xf32>
    %18 = vector.broadcast %17 : vector<8x1xf32> to vector<8x2xf32>
    %c0_8 = arith.constant 0 : index
    %c5 = arith.constant 5 : index
    %19 = vector.load %arg2[%c0_8, %c5] : memref<12x12xf32, #tpu.memory_space<vmem>>, vector<8x1xf32>
    %20 = vector.shape_cast %19 : vector<8x1xf32> to vector<8x1xf32>
    %21 = vector.broadcast %20 : vector<8x1xf32> to vector<8x2xf32>
    %c0_9 = arith.constant 0 : index
    %c6 = arith.constant 6 : index
    %22 = vector.load %arg2[%c0_9, %c6] : memref<12x12xf32, #tpu.memory_space<vmem>>, vector<8x1xf32>
    %23 = vector.shape_cast %22 : vector<8x1xf32> to vector<8x1xf32>
    %24 = vector.broadcast %23 : vector<8x1xf32> to vector<8x2xf32>
    %c0_10 = arith.constant 0 : index
    %c7 = arith.constant 7 : index
    %25 = vector.load %arg2[%c0_10, %c7] : memref<12x12xf32, #tpu.memory_space<vmem>>, vector<8x1xf32>
    %26 = vector.shape_cast %25 : vector<8x1xf32> to vector<8x1xf32>
    %27 = vector.broadcast %26 : vector<8x1xf32> to vector<8x2xf32>
    %c0_11 = arith.constant 0 : index
    %c8_12 = arith.constant 8 : index
    %28 = vector.load %arg2[%c0_11, %c8_12] : memref<12x12xf32, #tpu.memory_space<vmem>>, vector<8x1xf32>
    %29 = vector.shape_cast %28 : vector<8x1xf32> to vector<8x1xf32>
    %30 = vector.broadcast %29 : vector<8x1xf32> to vector<8x2xf32>
    %c0_13 = arith.constant 0 : index
    %c9 = arith.constant 9 : index
    %31 = vector.load %arg2[%c0_13, %c9] : memref<12x12xf32, #tpu.memory_space<vmem>>, vector<8x1xf32>
    %32 = vector.shape_cast %31 : vector<8x1xf32> to vector<8x1xf32>
    %33 = vector.broadcast %32 : vector<8x1xf32> to vector<8x2xf32>
    %c0_14 = arith.constant 0 : index
    %c10 = arith.constant 10 : index
    %34 = vector.load %arg2[%c0_14, %c10] : memref<12x12xf32, #tpu.memory_space<vmem>>, vector<8x1xf32>
    %35 = vector.shape_cast %34 : vector<8x1xf32> to vector<8x1xf32>
    %36 = vector.broadcast %35 : vector<8x1xf32> to vector<8x2xf32>
    %c0_15 = arith.constant 0 : index
    %c11 = arith.constant 11 : index
    %37 = vector.load %arg2[%c0_15, %c11] : memref<12x12xf32, #tpu.memory_space<vmem>>, vector<8x1xf32>
    %38 = vector.shape_cast %37 : vector<8x1xf32> to vector<8x1xf32>
    %39 = vector.broadcast %38 : vector<8x1xf32> to vector<8x2xf32>
    %40 = tpu.iota {dimensions = array<i32: 0>} : vector<8x1xi32>
    %c0_i32 = arith.constant 0 : i32
    %41 = vector.broadcast %c0_i32 : i32 to vector<8x1xi32>
    %42 = arith.cmpi eq, %40, %41 : vector<8x1xi32>
    %43 = arith.extui %42 : vector<8x1xi1> to vector<8x1xi32>
    %44 = arith.sitofp %43 : vector<8x1xi32> to vector<8x1xf32>
    %45 = vector.shape_cast %44 : vector<8x1xf32> to vector<8x1xf32>
    %46 = vector.broadcast %45 : vector<8x1xf32> to vector<8x2xf32>
    %cst = arith.constant 0.000000e+00 : f32
    %47 = vector.broadcast %cst : f32 to vector<1x2xf32>
    %c0_16 = arith.constant 0 : index
    %c0_17 = arith.constant 0 : index
    %48 = vector.load %arg1[%c0_16, %c0_17] : memref<2x64xf32, #tpu.memory_space<vmem>>, vector<2x8xf32>
    %cst_18 = arith.constant dense<0.000000e+00> : vector<4x2xf32>
    %49 = tpu.matmul %0, %48, %cst_18 {dimension_numbers = #tpu.dot_dimension_numbers<[1], [1], [0], [0], [0, 0, 1, 0], [], []>} : vector<4x8xf32>, vector<2x8xf32>, vector<4x2xf32> -> vector<4x2xf32>
    %50 = arith.addf %49, %3 : vector<4x2xf32>
    %c0_19 = arith.constant 0 : index
    %c0_20 = arith.constant 0 : index
    %c0_21 = arith.constant 0 : index
    %51 = vector.load %arg4[%c0_19, %c0_20, %c0_21] : memref<8x4x2xf32, #tpu.memory_space<vmem>>, vector<1x4x2xf32>
    %52 = vector.shape_cast %51 : vector<1x4x2xf32> to vector<4x2xf32>
    %53 = vector.shape_cast %50 : vector<4x2xf32> to vector<1x4x2xf32>
    tpu.vector_store %arg4[%c0_19, %c0_20, %c0_21], %53 {strides = array<i32>} : memref<8x4x2xf32, #tpu.memory_space<vmem>>, vector<1x4x2xf32>,
    %c0_22 = arith.constant 0 : index
    %c8_23 = arith.constant 8 : index
    %54 = vector.load %arg1[%c0_22, %c8_23] : memref<2x64xf32, #tpu.memory_space<vmem>>, vector<2x8xf32>
    %cst_24 = arith.constant dense<0.000000e+00> : vector<4x2xf32>
    %55 = tpu.matmul %0, %54, %cst_24 {dimension_numbers = #tpu.dot_dimension_numbers<[1], [1], [0], [0], [0, 0, 1, 0], [], []>} : vector<4x8xf32>, vector<2x8xf32>, vector<4x2xf32> -> vector<4x2xf32>
    %56 = arith.addf %55, %3 : vector<4x2xf32>
    %c1_25 = arith.constant 1 : index
    %c0_26 = arith.constant 0 : index
    %c0_27 = arith.constant 0 : index
    %57 = vector.load %arg4[%c1_25, %c0_26, %c0_27] : memref<8x4x2xf32, #tpu.memory_space<vmem>>, vector<1x4x2xf32>
    %58 = vector.shape_cast %57 : vector<1x4x2xf32> to vector<4x2xf32>
    %59 = vector.shape_cast %56 : vector<4x2xf32> to vector<1x4x2xf32>
    tpu.vector_store %arg4[%c1_25, %c0_26, %c0_27], %59 {strides = array<i32>} : memref<8x4x2xf32, #tpu.memory_space<vmem>>, vector<1x4x2xf32>,
    %c0_28 = arith.constant 0 : index
    %c16 = arith.constant 16 : index
    %60 = vector.load %arg1[%c0_28, %c16] : memref<2x64xf32, #tpu.memory_space<vmem>>, vector<2x8xf32>
    %cst_29 = arith.constant dense<0.000000e+00> : vector<4x2xf32>
    %61 = tpu.matmul %0, %60, %cst_29 {dimension_numbers = #tpu.dot_dimension_numbers<[1], [1], [0], [0], [0, 0, 1, 0], [], []>} : vector<4x8xf32>, vector<2x8xf32>, vector<4x2xf32> -> vector<4x2xf32>
    %62 = arith.addf %61, %3 : vector<4x2xf32>
    %c2_30 = arith.constant 2 : index
    %c0_31 = arith.constant 0 : index
    %c0_32 = arith.constant 0 : index
    %63 = vector.load %arg4[%c2_30, %c0_31, %c0_32] : memref<8x4x2xf32, #tpu.memory_space<vmem>>, vector<1x4x2xf32>
    %64 = vector.shape_cast %63 : vector<1x4x2xf32> to vector<4x2xf32>
    %65 = vector.shape_cast %62 : vector<4x2xf32> to vector<1x4x2xf32>
    tpu.vector_store %arg4[%c2_30, %c0_31, %c0_32], %65 {strides = array<i32>} : memref<8x4x2xf32, #tpu.memory_space<vmem>>, vector<1x4x2xf32>,
    %c0_33 = arith.constant 0 : index
    %c24 = arith.constant 24 : index
    %66 = vector.load %arg1[%c0_33, %c24] : memref<2x64xf32, #tpu.memory_space<vmem>>, vector<2x8xf32>
    %cst_34 = arith.constant dense<0.000000e+00> : vector<4x2xf32>
    %67 = tpu.matmul %0, %66, %cst_34 {dimension_numbers = #tpu.dot_dimension_numbers<[1], [1], [0], [0], [0, 0, 1, 0], [], []>} : vector<4x8xf32>, vector<2x8xf32>, vector<4x2xf32> -> vector<4x2xf32>
    %68 = arith.addf %67, %3 : vector<4x2xf32>
    %c3_35 = arith.constant 3 : index
    %c0_36 = arith.constant 0 : index
    %c0_37 = arith.constant 0 : index
    %69 = vector.load %arg4[%c3_35, %c0_36, %c0_37] : memref<8x4x2xf32, #tpu.memory_space<vmem>>, vector<1x4x2xf32>
    %70 = vector.shape_cast %69 : vector<1x4x2xf32> to vector<4x2xf32>
    %71 = vector.shape_cast %68 : vector<4x2xf32> to vector<1x4x2xf32>
    tpu.vector_store %arg4[%c3_35, %c0_36, %c0_37], %71 {strides = array<i32>} : memref<8x4x2xf32, #tpu.memory_space<vmem>>, vector<1x4x2xf32>,
    %c0_38 = arith.constant 0 : index
    %c32 = arith.constant 32 : index
    %72 = vector.load %arg1[%c0_38, %c32] : memref<2x64xf32, #tpu.memory_space<vmem>>, vector<2x8xf32>
    %cst_39 = arith.constant dense<0.000000e+00> : vector<4x2xf32>
    %73 = tpu.matmul %0, %72, %cst_39 {dimension_numbers = #tpu.dot_dimension_numbers<[1], [1], [0], [0], [0, 0, 1, 0], [], []>} : vector<4x8xf32>, vector<2x8xf32>, vector<4x2xf32> -> vector<4x2xf32>
    %74 = arith.addf %73, %3 : vector<4x2xf32>
    %c4_40 = arith.constant 4 : index
    %c0_41 = arith.constant 0 : index
    %c0_42 = arith.constant 0 : index
    %75 = vector.load %arg4[%c4_40, %c0_41, %c0_42] : memref<8x4x2xf32, #tpu.memory_space<vmem>>, vector<1x4x2xf32>
    %76 = vector.shape_cast %75 : vector<1x4x2xf32> to vector<4x2xf32>
    %77 = vector.shape_cast %74 : vector<4x2xf32> to vector<1x4x2xf32>
    tpu.vector_store %arg4[%c4_40, %c0_41, %c0_42], %77 {strides = array<i32>} : memref<8x4x2xf32, #tpu.memory_space<vmem>>, vector<1x4x2xf32>,
    %c0_43 = arith.constant 0 : index
    %c40 = arith.constant 40 : index
    %78 = vector.load %arg1[%c0_43, %c40] : memref<2x64xf32, #tpu.memory_space<vmem>>, vector<2x8xf32>
    %cst_44 = arith.constant dense<0.000000e+00> : vector<4x2xf32>
    %79 = tpu.matmul %0, %78, %cst_44 {dimension_numbers = #tpu.dot_dimension_numbers<[1], [1], [0], [0], [0, 0, 1, 0], [], []>} : vector<4x8xf32>, vector<2x8xf32>, vector<4x2xf32> -> vector<4x2xf32>
    %80 = arith.addf %79, %3 : vector<4x2xf32>
    %c5_45 = arith.constant 5 : index
    %c0_46 = arith.constant 0 : index
    %c0_47 = arith.constant 0 : index
    %81 = vector.load %arg4[%c5_45, %c0_46, %c0_47] : memref<8x4x2xf32, #tpu.memory_space<vmem>>, vector<1x4x2xf32>
    %82 = vector.shape_cast %81 : vector<1x4x2xf32> to vector<4x2xf32>
    %83 = vector.shape_cast %80 : vector<4x2xf32> to vector<1x4x2xf32>
    tpu.vector_store %arg4[%c5_45, %c0_46, %c0_47], %83 {strides = array<i32>} : memref<8x4x2xf32, #tpu.memory_space<vmem>>, vector<1x4x2xf32>,
    %c0_48 = arith.constant 0 : index
    %c48 = arith.constant 48 : index
    %84 = vector.load %arg1[%c0_48, %c48] : memref<2x64xf32, #tpu.memory_space<vmem>>, vector<2x8xf32>
    %cst_49 = arith.constant dense<0.000000e+00> : vector<4x2xf32>
    %85 = tpu.matmul %0, %84, %cst_49 {dimension_numbers = #tpu.dot_dimension_numbers<[1], [1], [0], [0], [0, 0, 1, 0], [], []>} : vector<4x8xf32>, vector<2x8xf32>, vector<4x2xf32> -> vector<4x2xf32>
    %86 = arith.addf %85, %3 : vector<4x2xf32>
    %c6_50 = arith.constant 6 : index
    %c0_51 = arith.constant 0 : index
    %c0_52 = arith.constant 0 : index
    %87 = vector.load %arg4[%c6_50, %c0_51, %c0_52] : memref<8x4x2xf32, #tpu.memory_space<vmem>>, vector<1x4x2xf32>
    %88 = vector.shape_cast %87 : vector<1x4x2xf32> to vector<4x2xf32>
    %89 = vector.shape_cast %86 : vector<4x2xf32> to vector<1x4x2xf32>
    tpu.vector_store %arg4[%c6_50, %c0_51, %c0_52], %89 {strides = array<i32>} : memref<8x4x2xf32, #tpu.memory_space<vmem>>, vector<1x4x2xf32>,
    %c0_53 = arith.constant 0 : index
    %c56 = arith.constant 56 : index
    %90 = vector.load %arg1[%c0_53, %c56] : memref<2x64xf32, #tpu.memory_space<vmem>>, vector<2x8xf32>
    %cst_54 = arith.constant dense<0.000000e+00> : vector<4x2xf32>
    %91 = tpu.matmul %0, %90, %cst_54 {dimension_numbers = #tpu.dot_dimension_numbers<[1], [1], [0], [0], [0, 0, 1, 0], [], []>} : vector<4x8xf32>, vector<2x8xf32>, vector<4x2xf32> -> vector<4x2xf32>
    %92 = arith.addf %91, %3 : vector<4x2xf32>
    %c7_55 = arith.constant 7 : index
    %c0_56 = arith.constant 0 : index
    %c0_57 = arith.constant 0 : index
    %93 = vector.load %arg4[%c7_55, %c0_56, %c0_57] : memref<8x4x2xf32, #tpu.memory_space<vmem>>, vector<1x4x2xf32>
    %94 = vector.shape_cast %93 : vector<1x4x2xf32> to vector<4x2xf32>
    %95 = vector.shape_cast %92 : vector<4x2xf32> to vector<1x4x2xf32>
    tpu.vector_store %arg4[%c7_55, %c0_56, %c0_57], %95 {strides = array<i32>} : memref<8x4x2xf32, #tpu.memory_space<vmem>>, vector<1x4x2xf32>,
    %cst_58 = arith.constant 0.000000e+00 : f32
    %96 = vector.broadcast %cst_58 : f32 to vector<8x2xf32>
    %cst_59 = arith.constant 0.000000e+00 : f32
    %97 = vector.broadcast %cst_59 : f32 to vector<8x2xf32>
    %c0_i32_60 = arith.constant 0 : i32
    %c7_i32 = arith.constant 7 : i32
    %98 = arith.minsi %c0_i32_60, %c7_i32 : i32
    %99 = arith.index_cast %98 : i32 to index
    %c0_61 = arith.constant 0 : index
    %c0_62 = arith.constant 0 : index
    %100 = vector.load %arg4[%99, %c0_61, %c0_62] : memref<8x4x2xf32, #tpu.memory_space<vmem>>, vector<1x4x2xf32>
    %101 = vector.shape_cast %100 : vector<1x4x2xf32> to vector<4x2xf32>
    %102 = vector.extract_strided_slice %96 {offsets = [0, 0], sizes = [7, 2], strides = [1, 1]} : vector<8x2xf32> to vector<7x2xf32>
    %103 = tpu.concatenate %47, %102 in 0 : vector<1x2xf32>, vector<7x2xf32> -> vector<8x2xf32>
    %104 = arith.mulf %6, %103 : vector<8x2xf32>
    %105 = arith.mulf %18, %96 : vector<8x2xf32>
    %106 = arith.addf %104, %105 : vector<8x2xf32>
    %107 = arith.addf %106, %30 : vector<8x2xf32>
    %108 = vector.extract_strided_slice %101 {offsets = [0, 0], sizes = [1, 2], strides = [1, 1]} : vector<4x2xf32> to vector<1x2xf32>
    %109 = vector.broadcast %108 : vector<1x2xf32> to vector<8x2xf32>
    %110 = arith.mulf %46, %109 : vector<8x2xf32>
    %111 = arith.addf %107, %110 : vector<8x2xf32>
    %112 = arith.negf %111 : vector<8x2xf32>
    %113 = math.exp %112 : vector<8x2xf32>
    %cst_63 = arith.constant 1.000000e+00 : f32
    %114 = vector.broadcast %cst_63 : f32 to vector<8x2xf32>
    %115 = arith.addf %114, %113 : vector<8x2xf32>
    %116 = arith.divf %114, %115 : vector<8x2xf32>
    %117 = arith.mulf %9, %103 : vector<8x2xf32>
    %118 = arith.mulf %21, %96 : vector<8x2xf32>
    %119 = arith.addf %117, %118 : vector<8x2xf32>
    %120 = arith.addf %119, %33 : vector<8x2xf32>
    %121 = vector.extract_strided_slice %101 {offsets = [1, 0], sizes = [1, 2], strides = [1, 1]} : vector<4x2xf32> to vector<1x2xf32>
    %122 = vector.broadcast %121 : vector<1x2xf32> to vector<8x2xf32>
    %123 = arith.mulf %46, %122 : vector<8x2xf32>
    %124 = arith.addf %120, %123 : vector<8x2xf32>
    %125 = arith.negf %124 : vector<8x2xf32>
    %126 = math.exp %125 : vector<8x2xf32>
    %cst_64 = arith.constant 1.000000e+00 : f32
    %127 = vector.broadcast %cst_64 : f32 to vector<8x2xf32>
    %128 = arith.addf %127, %126 : vector<8x2xf32>
    %129 = arith.divf %127, %128 : vector<8x2xf32>
    %130 = arith.mulf %12, %103 : vector<8x2xf32>
    %131 = arith.mulf %24, %96 : vector<8x2xf32>
    %132 = arith.addf %130, %131 : vector<8x2xf32>
    %133 = arith.addf %132, %36 : vector<8x2xf32>
    %134 = vector.extract_strided_slice %101 {offsets = [2, 0], sizes = [1, 2], strides = [1, 1]} : vector<4x2xf32> to vector<1x2xf32>
    %135 = vector.broadcast %134 : vector<1x2xf32> to vector<8x2xf32>
    %136 = arith.mulf %46, %135 : vector<8x2xf32>
    %137 = arith.addf %133, %136 : vector<8x2xf32>
    %138 = math.tanh %137 : vector<8x2xf32>
    %139 = arith.mulf %15, %103 : vector<8x2xf32>
    %140 = arith.mulf %27, %96 : vector<8x2xf32>
    %141 = arith.addf %139, %140 : vector<8x2xf32>
    %142 = arith.addf %141, %39 : vector<8x2xf32>
    %143 = vector.extract_strided_slice %101 {offsets = [3, 0], sizes = [1, 2], strides = [1, 1]} : vector<4x2xf32> to vector<1x2xf32>
    %144 = vector.broadcast %143 : vector<1x2xf32> to vector<8x2xf32>
    %145 = arith.mulf %46, %144 : vector<8x2xf32>
    %146 = arith.addf %142, %145 : vector<8x2xf32>
    %147 = arith.negf %146 : vector<8x2xf32>
    %148 = math.exp %147 : vector<8x2xf32>
    %cst_65 = arith.constant 1.000000e+00 : f32
    %149 = vector.broadcast %cst_65 : f32 to vector<8x2xf32>
    %150 = arith.addf %149, %148 : vector<8x2xf32>
    %151 = arith.divf %149, %150 : vector<8x2xf32>
    %152 = arith.mulf %129, %97 : vector<8x2xf32>
    %153 = arith.mulf %116, %138 : vector<8x2xf32>
    %154 = arith.addf %152, %153 : vector<8x2xf32>
    %155 = math.tanh %154 : vector<8x2xf32>
    %156 = arith.mulf %151, %155 : vector<8x2xf32>
    %157 = vector.broadcast %c0_i32_60 : i32 to vector<8x1xi32>
    %158 = arith.cmpi sge, %157, %40 : vector<8x1xi32>
    %159 = vector.broadcast %c0_i32_60 : i32 to vector<8x1xi32>
    %160 = arith.subi %159, %40 : vector<8x1xi32>
    %c8_i32 = arith.constant 8 : i32
    %161 = vector.broadcast %c8_i32 : i32 to vector<8x1xi32>
    %162 = arith.cmpi slt, %160, %161 : vector<8x1xi32>
    %163 = arith.andi %158, %162 : vector<8x1xi1>
    %164 = vector.shape_cast %163 : vector<8x1xi1> to vector<8x1xi1>
    %165 = vector.broadcast %164 : vector<8x1xi1> to vector<8x2xi1>
    %166 = arith.select %165, %156, %96 : vector<8x2xi1>, vector<8x2xf32>
    %167 = vector.shape_cast %163 : vector<8x1xi1> to vector<8x1xi1>
    %168 = vector.broadcast %167 : vector<8x1xi1> to vector<8x2xi1>
    %169 = arith.select %168, %154, %97 : vector<8x2xi1>, vector<8x2xf32>
    %c1_i32 = arith.constant 1 : i32
    %c7_i32_66 = arith.constant 7 : i32
    %170 = arith.minsi %c1_i32, %c7_i32_66 : i32
    %171 = arith.index_cast %170 : i32 to index
    %c0_67 = arith.constant 0 : index
    %c0_68 = arith.constant 0 : index
    %172 = vector.load %arg4[%171, %c0_67, %c0_68] : memref<8x4x2xf32, #tpu.memory_space<vmem>>, vector<1x4x2xf32>
    %173 = vector.shape_cast %172 : vector<1x4x2xf32> to vector<4x2xf32>
    %174 = vector.extract_strided_slice %166 {offsets = [0, 0], sizes = [7, 2], strides = [1, 1]} : vector<8x2xf32> to vector<7x2xf32>
    %175 = tpu.concatenate %47, %174 in 0 : vector<1x2xf32>, vector<7x2xf32> -> vector<8x2xf32>
    %176 = arith.mulf %6, %175 : vector<8x2xf32>
    %177 = arith.mulf %18, %166 : vector<8x2xf32>
    %178 = arith.addf %176, %177 : vector<8x2xf32>
    %179 = arith.addf %178, %30 : vector<8x2xf32>
    %180 = vector.extract_strided_slice %173 {offsets = [0, 0], sizes = [1, 2], strides = [1, 1]} : vector<4x2xf32> to vector<1x2xf32>
    %181 = vector.broadcast %180 : vector<1x2xf32> to vector<8x2xf32>
    %182 = arith.mulf %46, %181 : vector<8x2xf32>
    %183 = arith.addf %179, %182 : vector<8x2xf32>
    %184 = arith.negf %183 : vector<8x2xf32>
    %185 = math.exp %184 : vector<8x2xf32>
    %cst_69 = arith.constant 1.000000e+00 : f32
    %186 = vector.broadcast %cst_69 : f32 to vector<8x2xf32>
    %187 = arith.addf %186, %185 : vector<8x2xf32>
    %188 = arith.divf %186, %187 : vector<8x2xf32>
    %189 = arith.mulf %9, %175 : vector<8x2xf32>
    %190 = arith.mulf %21, %166 : vector<8x2xf32>
    %191 = arith.addf %189, %190 : vector<8x2xf32>
    %192 = arith.addf %191, %33 : vector<8x2xf32>
    %193 = vector.extract_strided_slice %173 {offsets = [1, 0], sizes = [1, 2], strides = [1, 1]} : vector<4x2xf32> to vector<1x2xf32>
    %194 = vector.broadcast %193 : vector<1x2xf32> to vector<8x2xf32>
    %195 = arith.mulf %46, %194 : vector<8x2xf32>
    %196 = arith.addf %192, %195 : vector<8x2xf32>
    %197 = arith.negf %196 : vector<8x2xf32>
    %198 = math.exp %197 : vector<8x2xf32>
    %cst_70 = arith.constant 1.000000e+00 : f32
    %199 = vector.broadcast %cst_70 : f32 to vector<8x2xf32>
    %200 = arith.addf %199, %198 : vector<8x2xf32>
    %201 = arith.divf %199, %200 : vector<8x2xf32>
    %202 = arith.mulf %12, %175 : vector<8x2xf32>
    %203 = arith.mulf %24, %166 : vector<8x2xf32>
    %204 = arith.addf %202, %203 : vector<8x2xf32>
    %205 = arith.addf %204, %36 : vector<8x2xf32>
    %206 = vector.extract_strided_slice %173 {offsets = [2, 0], sizes = [1, 2], strides = [1, 1]} : vector<4x2xf32> to vector<1x2xf32>
    %207 = vector.broadcast %206 : vector<1x2xf32> to vector<8x2xf32>
    %208 = arith.mulf %46, %207 : vector<8x2xf32>
    %209 = arith.addf %205, %208 : vector<8x2xf32>
    %210 = math.tanh %209 : vector<8x2xf32>
    %211 = arith.mulf %15, %175 : vector<8x2xf32>
    %212 = arith.mulf %27, %166 : vector<8x2xf32>
    %213 = arith.addf %211, %212 : vector<8x2xf32>
    %214 = arith.addf %213, %39 : vector<8x2xf32>
    %215 = vector.extract_strided_slice %173 {offsets = [3, 0], sizes = [1, 2], strides = [1, 1]} : vector<4x2xf32> to vector<1x2xf32>
    %216 = vector.broadcast %215 : vector<1x2xf32> to vector<8x2xf32>
    %217 = arith.mulf %46, %216 : vector<8x2xf32>
    %218 = arith.addf %214, %217 : vector<8x2xf32>
    %219 = arith.negf %218 : vector<8x2xf32>
    %220 = math.exp %219 : vector<8x2xf32>
    %cst_71 = arith.constant 1.000000e+00 : f32
    %221 = vector.broadcast %cst_71 : f32 to vector<8x2xf32>
    %222 = arith.addf %221, %220 : vector<8x2xf32>
    %223 = arith.divf %221, %222 : vector<8x2xf32>
    %224 = arith.mulf %201, %169 : vector<8x2xf32>
    %225 = arith.mulf %188, %210 : vector<8x2xf32>
    %226 = arith.addf %224, %225 : vector<8x2xf32>
    %227 = math.tanh %226 : vector<8x2xf32>
    %228 = arith.mulf %223, %227 : vector<8x2xf32>
    %229 = vector.broadcast %c1_i32 : i32 to vector<8x1xi32>
    %230 = arith.cmpi sge, %229, %40 : vector<8x1xi32>
    %231 = vector.broadcast %c1_i32 : i32 to vector<8x1xi32>
    %232 = arith.subi %231, %40 : vector<8x1xi32>
    %c8_i32_72 = arith.constant 8 : i32
    %233 = vector.broadcast %c8_i32_72 : i32 to vector<8x1xi32>
    %234 = arith.cmpi slt, %232, %233 : vector<8x1xi32>
    %235 = arith.andi %230, %234 : vector<8x1xi1>
    %236 = vector.shape_cast %235 : vector<8x1xi1> to vector<8x1xi1>
    %237 = vector.broadcast %236 : vector<8x1xi1> to vector<8x2xi1>
    %238 = arith.select %237, %228, %166 : vector<8x2xi1>, vector<8x2xf32>
    %239 = vector.shape_cast %235 : vector<8x1xi1> to vector<8x1xi1>
    %240 = vector.broadcast %239 : vector<8x1xi1> to vector<8x2xi1>
    %241 = arith.select %240, %226, %169 : vector<8x2xi1>, vector<8x2xf32>
    %c2_i32 = arith.constant 2 : i32
    %c7_i32_73 = arith.constant 7 : i32
    %242 = arith.minsi %c2_i32, %c7_i32_73 : i32
    %243 = arith.index_cast %242 : i32 to index
    %c0_74 = arith.constant 0 : index
    %c0_75 = arith.constant 0 : index
    %244 = vector.load %arg4[%243, %c0_74, %c0_75] : memref<8x4x2xf32, #tpu.memory_space<vmem>>, vector<1x4x2xf32>
    %245 = vector.shape_cast %244 : vector<1x4x2xf32> to vector<4x2xf32>
    %246 = vector.extract_strided_slice %238 {offsets = [0, 0], sizes = [7, 2], strides = [1, 1]} : vector<8x2xf32> to vector<7x2xf32>
    %247 = tpu.concatenate %47, %246 in 0 : vector<1x2xf32>, vector<7x2xf32> -> vector<8x2xf32>
    %248 = arith.mulf %6, %247 : vector<8x2xf32>
    %249 = arith.mulf %18, %238 : vector<8x2xf32>
    %250 = arith.addf %248, %249 : vector<8x2xf32>
    %251 = arith.addf %250, %30 : vector<8x2xf32>
    %252 = vector.extract_strided_slice %245 {offsets = [0, 0], sizes = [1, 2], strides = [1, 1]} : vector<4x2xf32> to vector<1x2xf32>
    %253 = vector.broadcast %252 : vector<1x2xf32> to vector<8x2xf32>
    %254 = arith.mulf %46, %253 : vector<8x2xf32>
    %255 = arith.addf %251, %254 : vector<8x2xf32>
    %256 = arith.negf %255 : vector<8x2xf32>
    %257 = math.exp %256 : vector<8x2xf32>
    %cst_76 = arith.constant 1.000000e+00 : f32
    %258 = vector.broadcast %cst_76 : f32 to vector<8x2xf32>
    %259 = arith.addf %258, %257 : vector<8x2xf32>
    %260 = arith.divf %258, %259 : vector<8x2xf32>
    %261 = arith.mulf %9, %247 : vector<8x2xf32>
    %262 = arith.mulf %21, %238 : vector<8x2xf32>
    %263 = arith.addf %261, %262 : vector<8x2xf32>
    %264 = arith.addf %263, %33 : vector<8x2xf32>
    %265 = vector.extract_strided_slice %245 {offsets = [1, 0], sizes = [1, 2], strides = [1, 1]} : vector<4x2xf32> to vector<1x2xf32>
    %266 = vector.broadcast %265 : vector<1x2xf32> to vector<8x2xf32>
    %267 = arith.mulf %46, %266 : vector<8x2xf32>
    %268 = arith.addf %264, %267 : vector<8x2xf32>
    %269 = arith.negf %268 : vector<8x2xf32>
    %270 = math.exp %269 : vector<8x2xf32>
    %cst_77 = arith.constant 1.000000e+00 : f32
    %271 = vector.broadcast %cst_77 : f32 to vector<8x2xf32>
    %272 = arith.addf %271, %270 : vector<8x2xf32>
    %273 = arith.divf %271, %272 : vector<8x2xf32>
    %274 = arith.mulf %12, %247 : vector<8x2xf32>
    %275 = arith.mulf %24, %238 : vector<8x2xf32>
    %276 = arith.addf %274, %275 : vector<8x2xf32>
    %277 = arith.addf %276, %36 : vector<8x2xf32>
    %278 = vector.extract_strided_slice %245 {offsets = [2, 0], sizes = [1, 2], strides = [1, 1]} : vector<4x2xf32> to vector<1x2xf32>
    %279 = vector.broadcast %278 : vector<1x2xf32> to vector<8x2xf32>
    %280 = arith.mulf %46, %279 : vector<8x2xf32>
    %281 = arith.addf %277, %280 : vector<8x2xf32>
    %282 = math.tanh %281 : vector<8x2xf32>
    %283 = arith.mulf %15, %247 : vector<8x2xf32>
    %284 = arith.mulf %27, %238 : vector<8x2xf32>
    %285 = arith.addf %283, %284 : vector<8x2xf32>
    %286 = arith.addf %285, %39 : vector<8x2xf32>
    %287 = vector.extract_strided_slice %245 {offsets = [3, 0], sizes = [1, 2], strides = [1, 1]} : vector<4x2xf32> to vector<1x2xf32>
    %288 = vector.broadcast %287 : vector<1x2xf32> to vector<8x2xf32>
    %289 = arith.mulf %46, %288 : vector<8x2xf32>
    %290 = arith.addf %286, %289 : vector<8x2xf32>
    %291 = arith.negf %290 : vector<8x2xf32>
    %292 = math.exp %291 : vector<8x2xf32>
    %cst_78 = arith.constant 1.000000e+00 : f32
    %293 = vector.broadcast %cst_78 : f32 to vector<8x2xf32>
    %294 = arith.addf %293, %292 : vector<8x2xf32>
    %295 = arith.divf %293, %294 : vector<8x2xf32>
    %296 = arith.mulf %273, %241 : vector<8x2xf32>
    %297 = arith.mulf %260, %282 : vector<8x2xf32>
    %298 = arith.addf %296, %297 : vector<8x2xf32>
    %299 = math.tanh %298 : vector<8x2xf32>
    %300 = arith.mulf %295, %299 : vector<8x2xf32>
    %301 = vector.broadcast %c2_i32 : i32 to vector<8x1xi32>
    %302 = arith.cmpi sge, %301, %40 : vector<8x1xi32>
    %303 = vector.broadcast %c2_i32 : i32 to vector<8x1xi32>
    %304 = arith.subi %303, %40 : vector<8x1xi32>
    %c8_i32_79 = arith.constant 8 : i32
    %305 = vector.broadcast %c8_i32_79 : i32 to vector<8x1xi32>
    %306 = arith.cmpi slt, %304, %305 : vector<8x1xi32>
    %307 = arith.andi %302, %306 : vector<8x1xi1>
    %308 = vector.shape_cast %307 : vector<8x1xi1> to vector<8x1xi1>
    %309 = vector.broadcast %308 : vector<8x1xi1> to vector<8x2xi1>
    %310 = arith.select %309, %300, %238 : vector<8x2xi1>, vector<8x2xf32>
    %311 = vector.shape_cast %307 : vector<8x1xi1> to vector<8x1xi1>
    %312 = vector.broadcast %311 : vector<8x1xi1> to vector<8x2xi1>
    %313 = arith.select %312, %298, %241 : vector<8x2xi1>, vector<8x2xf32>
    %c3_i32 = arith.constant 3 : i32
    %c7_i32_80 = arith.constant 7 : i32
    %314 = arith.minsi %c3_i32, %c7_i32_80 : i32
    %315 = arith.index_cast %314 : i32 to index
    %c0_81 = arith.constant 0 : index
    %c0_82 = arith.constant 0 : index
    %316 = vector.load %arg4[%315, %c0_81, %c0_82] : memref<8x4x2xf32, #tpu.memory_space<vmem>>, vector<1x4x2xf32>
    %317 = vector.shape_cast %316 : vector<1x4x2xf32> to vector<4x2xf32>
    %318 = vector.extract_strided_slice %310 {offsets = [0, 0], sizes = [7, 2], strides = [1, 1]} : vector<8x2xf32> to vector<7x2xf32>
    %319 = tpu.concatenate %47, %318 in 0 : vector<1x2xf32>, vector<7x2xf32> -> vector<8x2xf32>
    %320 = arith.mulf %6, %319 : vector<8x2xf32>
    %321 = arith.mulf %18, %310 : vector<8x2xf32>
    %322 = arith.addf %320, %321 : vector<8x2xf32>
    %323 = arith.addf %322, %30 : vector<8x2xf32>
    %324 = vector.extract_strided_slice %317 {offsets = [0, 0], sizes = [1, 2], strides = [1, 1]} : vector<4x2xf32> to vector<1x2xf32>
    %325 = vector.broadcast %324 : vector<1x2xf32> to vector<8x2xf32>
    %326 = arith.mulf %46, %325 : vector<8x2xf32>
    %327 = arith.addf %323, %326 : vector<8x2xf32>
    %328 = arith.negf %327 : vector<8x2xf32>
    %329 = math.exp %328 : vector<8x2xf32>
    %cst_83 = arith.constant 1.000000e+00 : f32
    %330 = vector.broadcast %cst_83 : f32 to vector<8x2xf32>
    %331 = arith.addf %330, %329 : vector<8x2xf32>
    %332 = arith.divf %330, %331 : vector<8x2xf32>
    %333 = arith.mulf %9, %319 : vector<8x2xf32>
    %334 = arith.mulf %21, %310 : vector<8x2xf32>
    %335 = arith.addf %333, %334 : vector<8x2xf32>
    %336 = arith.addf %335, %33 : vector<8x2xf32>
    %337 = vector.extract_strided_slice %317 {offsets = [1, 0], sizes = [1, 2], strides = [1, 1]} : vector<4x2xf32> to vector<1x2xf32>
    %338 = vector.broadcast %337 : vector<1x2xf32> to vector<8x2xf32>
    %339 = arith.mulf %46, %338 : vector<8x2xf32>
    %340 = arith.addf %336, %339 : vector<8x2xf32>
    %341 = arith.negf %340 : vector<8x2xf32>
    %342 = math.exp %341 : vector<8x2xf32>
    %cst_84 = arith.constant 1.000000e+00 : f32
    %343 = vector.broadcast %cst_84 : f32 to vector<8x2xf32>
    %344 = arith.addf %343, %342 : vector<8x2xf32>
    %345 = arith.divf %343, %344 : vector<8x2xf32>
    %346 = arith.mulf %12, %319 : vector<8x2xf32>
    %347 = arith.mulf %24, %310 : vector<8x2xf32>
    %348 = arith.addf %346, %347 : vector<8x2xf32>
    %349 = arith.addf %348, %36 : vector<8x2xf32>
    %350 = vector.extract_strided_slice %317 {offsets = [2, 0], sizes = [1, 2], strides = [1, 1]} : vector<4x2xf32> to vector<1x2xf32>
    %351 = vector.broadcast %350 : vector<1x2xf32> to vector<8x2xf32>
    %352 = arith.mulf %46, %351 : vector<8x2xf32>
    %353 = arith.addf %349, %352 : vector<8x2xf32>
    %354 = math.tanh %353 : vector<8x2xf32>
    %355 = arith.mulf %15, %319 : vector<8x2xf32>
    %356 = arith.mulf %27, %310 : vector<8x2xf32>
    %357 = arith.addf %355, %356 : vector<8x2xf32>
    %358 = arith.addf %357, %39 : vector<8x2xf32>
    %359 = vector.extract_strided_slice %317 {offsets = [3, 0], sizes = [1, 2], strides = [1, 1]} : vector<4x2xf32> to vector<1x2xf32>
    %360 = vector.broadcast %359 : vector<1x2xf32> to vector<8x2xf32>
    %361 = arith.mulf %46, %360 : vector<8x2xf32>
    %362 = arith.addf %358, %361 : vector<8x2xf32>
    %363 = arith.negf %362 : vector<8x2xf32>
    %364 = math.exp %363 : vector<8x2xf32>
    %cst_85 = arith.constant 1.000000e+00 : f32
    %365 = vector.broadcast %cst_85 : f32 to vector<8x2xf32>
    %366 = arith.addf %365, %364 : vector<8x2xf32>
    %367 = arith.divf %365, %366 : vector<8x2xf32>
    %368 = arith.mulf %345, %313 : vector<8x2xf32>
    %369 = arith.mulf %332, %354 : vector<8x2xf32>
    %370 = arith.addf %368, %369 : vector<8x2xf32>
    %371 = math.tanh %370 : vector<8x2xf32>
    %372 = arith.mulf %367, %371 : vector<8x2xf32>
    %373 = vector.broadcast %c3_i32 : i32 to vector<8x1xi32>
    %374 = arith.cmpi sge, %373, %40 : vector<8x1xi32>
    %375 = vector.broadcast %c3_i32 : i32 to vector<8x1xi32>
    %376 = arith.subi %375, %40 : vector<8x1xi32>
    %c8_i32_86 = arith.constant 8 : i32
    %377 = vector.broadcast %c8_i32_86 : i32 to vector<8x1xi32>
    %378 = arith.cmpi slt, %376, %377 : vector<8x1xi32>
    %379 = arith.andi %374, %378 : vector<8x1xi1>
    %380 = vector.shape_cast %379 : vector<8x1xi1> to vector<8x1xi1>
    %381 = vector.broadcast %380 : vector<8x1xi1> to vector<8x2xi1>
    %382 = arith.select %381, %372, %310 : vector<8x2xi1>, vector<8x2xf32>
    %383 = vector.shape_cast %379 : vector<8x1xi1> to vector<8x1xi1>
    %384 = vector.broadcast %383 : vector<8x1xi1> to vector<8x2xi1>
    %385 = arith.select %384, %370, %313 : vector<8x2xi1>, vector<8x2xf32>
    %c4_i32 = arith.constant 4 : i32
    %c7_i32_87 = arith.constant 7 : i32
    %386 = arith.minsi %c4_i32, %c7_i32_87 : i32
    %387 = arith.index_cast %386 : i32 to index
    %c0_88 = arith.constant 0 : index
    %c0_89 = arith.constant 0 : index
    %388 = vector.load %arg4[%387, %c0_88, %c0_89] : memref<8x4x2xf32, #tpu.memory_space<vmem>>, vector<1x4x2xf32>
    %389 = vector.shape_cast %388 : vector<1x4x2xf32> to vector<4x2xf32>
    %390 = vector.extract_strided_slice %382 {offsets = [0, 0], sizes = [7, 2], strides = [1, 1]} : vector<8x2xf32> to vector<7x2xf32>
    %391 = tpu.concatenate %47, %390 in 0 : vector<1x2xf32>, vector<7x2xf32> -> vector<8x2xf32>
    %392 = arith.mulf %6, %391 : vector<8x2xf32>
    %393 = arith.mulf %18, %382 : vector<8x2xf32>
    %394 = arith.addf %392, %393 : vector<8x2xf32>
    %395 = arith.addf %394, %30 : vector<8x2xf32>
    %396 = vector.extract_strided_slice %389 {offsets = [0, 0], sizes = [1, 2], strides = [1, 1]} : vector<4x2xf32> to vector<1x2xf32>
    %397 = vector.broadcast %396 : vector<1x2xf32> to vector<8x2xf32>
    %398 = arith.mulf %46, %397 : vector<8x2xf32>
    %399 = arith.addf %395, %398 : vector<8x2xf32>
    %400 = arith.negf %399 : vector<8x2xf32>
    %401 = math.exp %400 : vector<8x2xf32>
    %cst_90 = arith.constant 1.000000e+00 : f32
    %402 = vector.broadcast %cst_90 : f32 to vector<8x2xf32>
    %403 = arith.addf %402, %401 : vector<8x2xf32>
    %404 = arith.divf %402, %403 : vector<8x2xf32>
    %405 = arith.mulf %9, %391 : vector<8x2xf32>
    %406 = arith.mulf %21, %382 : vector<8x2xf32>
    %407 = arith.addf %405, %406 : vector<8x2xf32>
    %408 = arith.addf %407, %33 : vector<8x2xf32>
    %409 = vector.extract_strided_slice %389 {offsets = [1, 0], sizes = [1, 2], strides = [1, 1]} : vector<4x2xf32> to vector<1x2xf32>
    %410 = vector.broadcast %409 : vector<1x2xf32> to vector<8x2xf32>
    %411 = arith.mulf %46, %410 : vector<8x2xf32>
    %412 = arith.addf %408, %411 : vector<8x2xf32>
    %413 = arith.negf %412 : vector<8x2xf32>
    %414 = math.exp %413 : vector<8x2xf32>
    %cst_91 = arith.constant 1.000000e+00 : f32
    %415 = vector.broadcast %cst_91 : f32 to vector<8x2xf32>
    %416 = arith.addf %415, %414 : vector<8x2xf32>
    %417 = arith.divf %415, %416 : vector<8x2xf32>
    %418 = arith.mulf %12, %391 : vector<8x2xf32>
    %419 = arith.mulf %24, %382 : vector<8x2xf32>
    %420 = arith.addf %418, %419 : vector<8x2xf32>
    %421 = arith.addf %420, %36 : vector<8x2xf32>
    %422 = vector.extract_strided_slice %389 {offsets = [2, 0], sizes = [1, 2], strides = [1, 1]} : vector<4x2xf32> to vector<1x2xf32>
    %423 = vector.broadcast %422 : vector<1x2xf32> to vector<8x2xf32>
    %424 = arith.mulf %46, %423 : vector<8x2xf32>
    %425 = arith.addf %421, %424 : vector<8x2xf32>
    %426 = math.tanh %425 : vector<8x2xf32>
    %427 = arith.mulf %15, %391 : vector<8x2xf32>
    %428 = arith.mulf %27, %382 : vector<8x2xf32>
    %429 = arith.addf %427, %428 : vector<8x2xf32>
    %430 = arith.addf %429, %39 : vector<8x2xf32>
    %431 = vector.extract_strided_slice %389 {offsets = [3, 0], sizes = [1, 2], strides = [1, 1]} : vector<4x2xf32> to vector<1x2xf32>
    %432 = vector.broadcast %431 : vector<1x2xf32> to vector<8x2xf32>
    %433 = arith.mulf %46, %432 : vector<8x2xf32>
    %434 = arith.addf %430, %433 : vector<8x2xf32>
    %435 = arith.negf %434 : vector<8x2xf32>
    %436 = math.exp %435 : vector<8x2xf32>
    %cst_92 = arith.constant 1.000000e+00 : f32
    %437 = vector.broadcast %cst_92 : f32 to vector<8x2xf32>
    %438 = arith.addf %437, %436 : vector<8x2xf32>
    %439 = arith.divf %437, %438 : vector<8x2xf32>
    %440 = arith.mulf %417, %385 : vector<8x2xf32>
    %441 = arith.mulf %404, %426 : vector<8x2xf32>
    %442 = arith.addf %440, %441 : vector<8x2xf32>
    %443 = math.tanh %442 : vector<8x2xf32>
    %444 = arith.mulf %439, %443 : vector<8x2xf32>
    %445 = vector.broadcast %c4_i32 : i32 to vector<8x1xi32>
    %446 = arith.cmpi sge, %445, %40 : vector<8x1xi32>
    %447 = vector.broadcast %c4_i32 : i32 to vector<8x1xi32>
    %448 = arith.subi %447, %40 : vector<8x1xi32>
    %c8_i32_93 = arith.constant 8 : i32
    %449 = vector.broadcast %c8_i32_93 : i32 to vector<8x1xi32>
    %450 = arith.cmpi slt, %448, %449 : vector<8x1xi32>
    %451 = arith.andi %446, %450 : vector<8x1xi1>
    %452 = vector.shape_cast %451 : vector<8x1xi1> to vector<8x1xi1>
    %453 = vector.broadcast %452 : vector<8x1xi1> to vector<8x2xi1>
    %454 = arith.select %453, %444, %382 : vector<8x2xi1>, vector<8x2xf32>
    %455 = vector.shape_cast %451 : vector<8x1xi1> to vector<8x1xi1>
    %456 = vector.broadcast %455 : vector<8x1xi1> to vector<8x2xi1>
    %457 = arith.select %456, %442, %385 : vector<8x2xi1>, vector<8x2xf32>
    %c5_i32 = arith.constant 5 : i32
    %c7_i32_94 = arith.constant 7 : i32
    %458 = arith.minsi %c5_i32, %c7_i32_94 : i32
    %459 = arith.index_cast %458 : i32 to index
    %c0_95 = arith.constant 0 : index
    %c0_96 = arith.constant 0 : index
    %460 = vector.load %arg4[%459, %c0_95, %c0_96] : memref<8x4x2xf32, #tpu.memory_space<vmem>>, vector<1x4x2xf32>
    %461 = vector.shape_cast %460 : vector<1x4x2xf32> to vector<4x2xf32>
    %462 = vector.extract_strided_slice %454 {offsets = [0, 0], sizes = [7, 2], strides = [1, 1]} : vector<8x2xf32> to vector<7x2xf32>
    %463 = tpu.concatenate %47, %462 in 0 : vector<1x2xf32>, vector<7x2xf32> -> vector<8x2xf32>
    %464 = arith.mulf %6, %463 : vector<8x2xf32>
    %465 = arith.mulf %18, %454 : vector<8x2xf32>
    %466 = arith.addf %464, %465 : vector<8x2xf32>
    %467 = arith.addf %466, %30 : vector<8x2xf32>
    %468 = vector.extract_strided_slice %461 {offsets = [0, 0], sizes = [1, 2], strides = [1, 1]} : vector<4x2xf32> to vector<1x2xf32>
    %469 = vector.broadcast %468 : vector<1x2xf32> to vector<8x2xf32>
    %470 = arith.mulf %46, %469 : vector<8x2xf32>
    %471 = arith.addf %467, %470 : vector<8x2xf32>
    %472 = arith.negf %471 : vector<8x2xf32>
    %473 = math.exp %472 : vector<8x2xf32>
    %cst_97 = arith.constant 1.000000e+00 : f32
    %474 = vector.broadcast %cst_97 : f32 to vector<8x2xf32>
    %475 = arith.addf %474, %473 : vector<8x2xf32>
    %476 = arith.divf %474, %475 : vector<8x2xf32>
    %477 = arith.mulf %9, %463 : vector<8x2xf32>
    %478 = arith.mulf %21, %454 : vector<8x2xf32>
    %479 = arith.addf %477, %478 : vector<8x2xf32>
    %480 = arith.addf %479, %33 : vector<8x2xf32>
    %481 = vector.extract_strided_slice %461 {offsets = [1, 0], sizes = [1, 2], strides = [1, 1]} : vector<4x2xf32> to vector<1x2xf32>
    %482 = vector.broadcast %481 : vector<1x2xf32> to vector<8x2xf32>
    %483 = arith.mulf %46, %482 : vector<8x2xf32>
    %484 = arith.addf %480, %483 : vector<8x2xf32>
    %485 = arith.negf %484 : vector<8x2xf32>
    %486 = math.exp %485 : vector<8x2xf32>
    %cst_98 = arith.constant 1.000000e+00 : f32
    %487 = vector.broadcast %cst_98 : f32 to vector<8x2xf32>
    %488 = arith.addf %487, %486 : vector<8x2xf32>
    %489 = arith.divf %487, %488 : vector<8x2xf32>
    %490 = arith.mulf %12, %463 : vector<8x2xf32>
    %491 = arith.mulf %24, %454 : vector<8x2xf32>
    %492 = arith.addf %490, %491 : vector<8x2xf32>
    %493 = arith.addf %492, %36 : vector<8x2xf32>
    %494 = vector.extract_strided_slice %461 {offsets = [2, 0], sizes = [1, 2], strides = [1, 1]} : vector<4x2xf32> to vector<1x2xf32>
    %495 = vector.broadcast %494 : vector<1x2xf32> to vector<8x2xf32>
    %496 = arith.mulf %46, %495 : vector<8x2xf32>
    %497 = arith.addf %493, %496 : vector<8x2xf32>
    %498 = math.tanh %497 : vector<8x2xf32>
    %499 = arith.mulf %15, %463 : vector<8x2xf32>
    %500 = arith.mulf %27, %454 : vector<8x2xf32>
    %501 = arith.addf %499, %500 : vector<8x2xf32>
    %502 = arith.addf %501, %39 : vector<8x2xf32>
    %503 = vector.extract_strided_slice %461 {offsets = [3, 0], sizes = [1, 2], strides = [1, 1]} : vector<4x2xf32> to vector<1x2xf32>
    %504 = vector.broadcast %503 : vector<1x2xf32> to vector<8x2xf32>
    %505 = arith.mulf %46, %504 : vector<8x2xf32>
    %506 = arith.addf %502, %505 : vector<8x2xf32>
    %507 = arith.negf %506 : vector<8x2xf32>
    %508 = math.exp %507 : vector<8x2xf32>
    %cst_99 = arith.constant 1.000000e+00 : f32
    %509 = vector.broadcast %cst_99 : f32 to vector<8x2xf32>
    %510 = arith.addf %509, %508 : vector<8x2xf32>
    %511 = arith.divf %509, %510 : vector<8x2xf32>
    %512 = arith.mulf %489, %457 : vector<8x2xf32>
    %513 = arith.mulf %476, %498 : vector<8x2xf32>
    %514 = arith.addf %512, %513 : vector<8x2xf32>
    %515 = math.tanh %514 : vector<8x2xf32>
    %516 = arith.mulf %511, %515 : vector<8x2xf32>
    %517 = vector.broadcast %c5_i32 : i32 to vector<8x1xi32>
    %518 = arith.cmpi sge, %517, %40 : vector<8x1xi32>
    %519 = vector.broadcast %c5_i32 : i32 to vector<8x1xi32>
    %520 = arith.subi %519, %40 : vector<8x1xi32>
    %c8_i32_100 = arith.constant 8 : i32
    %521 = vector.broadcast %c8_i32_100 : i32 to vector<8x1xi32>
    %522 = arith.cmpi slt, %520, %521 : vector<8x1xi32>
    %523 = arith.andi %518, %522 : vector<8x1xi1>
    %524 = vector.shape_cast %523 : vector<8x1xi1> to vector<8x1xi1>
    %525 = vector.broadcast %524 : vector<8x1xi1> to vector<8x2xi1>
    %526 = arith.select %525, %516, %454 : vector<8x2xi1>, vector<8x2xf32>
    %527 = vector.shape_cast %523 : vector<8x1xi1> to vector<8x1xi1>
    %528 = vector.broadcast %527 : vector<8x1xi1> to vector<8x2xi1>
    %529 = arith.select %528, %514, %457 : vector<8x2xi1>, vector<8x2xf32>
    %c6_i32 = arith.constant 6 : i32
    %c7_i32_101 = arith.constant 7 : i32
    %530 = arith.minsi %c6_i32, %c7_i32_101 : i32
    %531 = arith.index_cast %530 : i32 to index
    %c0_102 = arith.constant 0 : index
    %c0_103 = arith.constant 0 : index
    %532 = vector.load %arg4[%531, %c0_102, %c0_103] : memref<8x4x2xf32, #tpu.memory_space<vmem>>, vector<1x4x2xf32>
    %533 = vector.shape_cast %532 : vector<1x4x2xf32> to vector<4x2xf32>
    %534 = vector.extract_strided_slice %526 {offsets = [0, 0], sizes = [7, 2], strides = [1, 1]} : vector<8x2xf32> to vector<7x2xf32>
    %535 = tpu.concatenate %47, %534 in 0 : vector<1x2xf32>, vector<7x2xf32> -> vector<8x2xf32>
    %536 = arith.mulf %6, %535 : vector<8x2xf32>
    %537 = arith.mulf %18, %526 : vector<8x2xf32>
    %538 = arith.addf %536, %537 : vector<8x2xf32>
    %539 = arith.addf %538, %30 : vector<8x2xf32>
    %540 = vector.extract_strided_slice %533 {offsets = [0, 0], sizes = [1, 2], strides = [1, 1]} : vector<4x2xf32> to vector<1x2xf32>
    %541 = vector.broadcast %540 : vector<1x2xf32> to vector<8x2xf32>
    %542 = arith.mulf %46, %541 : vector<8x2xf32>
    %543 = arith.addf %539, %542 : vector<8x2xf32>
    %544 = arith.negf %543 : vector<8x2xf32>
    %545 = math.exp %544 : vector<8x2xf32>
    %cst_104 = arith.constant 1.000000e+00 : f32
    %546 = vector.broadcast %cst_104 : f32 to vector<8x2xf32>
    %547 = arith.addf %546, %545 : vector<8x2xf32>
    %548 = arith.divf %546, %547 : vector<8x2xf32>
    %549 = arith.mulf %9, %535 : vector<8x2xf32>
    %550 = arith.mulf %21, %526 : vector<8x2xf32>
    %551 = arith.addf %549, %550 : vector<8x2xf32>
    %552 = arith.addf %551, %33 : vector<8x2xf32>
    %553 = vector.extract_strided_slice %533 {offsets = [1, 0], sizes = [1, 2], strides = [1, 1]} : vector<4x2xf32> to vector<1x2xf32>
    %554 = vector.broadcast %553 : vector<1x2xf32> to vector<8x2xf32>
    %555 = arith.mulf %46, %554 : vector<8x2xf32>
    %556 = arith.addf %552, %555 : vector<8x2xf32>
    %557 = arith.negf %556 : vector<8x2xf32>
    %558 = math.exp %557 : vector<8x2xf32>
    %cst_105 = arith.constant 1.000000e+00 : f32
    %559 = vector.broadcast %cst_105 : f32 to vector<8x2xf32>
    %560 = arith.addf %559, %558 : vector<8x2xf32>
    %561 = arith.divf %559, %560 : vector<8x2xf32>
    %562 = arith.mulf %12, %535 : vector<8x2xf32>
    %563 = arith.mulf %24, %526 : vector<8x2xf32>
    %564 = arith.addf %562, %563 : vector<8x2xf32>
    %565 = arith.addf %564, %36 : vector<8x2xf32>
    %566 = vector.extract_strided_slice %533 {offsets = [2, 0], sizes = [1, 2], strides = [1, 1]} : vector<4x2xf32> to vector<1x2xf32>
    %567 = vector.broadcast %566 : vector<1x2xf32> to vector<8x2xf32>
    %568 = arith.mulf %46, %567 : vector<8x2xf32>
    %569 = arith.addf %565, %568 : vector<8x2xf32>
    %570 = math.tanh %569 : vector<8x2xf32>
    %571 = arith.mulf %15, %535 : vector<8x2xf32>
    %572 = arith.mulf %27, %526 : vector<8x2xf32>
    %573 = arith.addf %571, %572 : vector<8x2xf32>
    %574 = arith.addf %573, %39 : vector<8x2xf32>
    %575 = vector.extract_strided_slice %533 {offsets = [3, 0], sizes = [1, 2], strides = [1, 1]} : vector<4x2xf32> to vector<1x2xf32>
    %576 = vector.broadcast %575 : vector<1x2xf32> to vector<8x2xf32>
    %577 = arith.mulf %46, %576 : vector<8x2xf32>
    %578 = arith.addf %574, %577 : vector<8x2xf32>
    %579 = arith.negf %578 : vector<8x2xf32>
    %580 = math.exp %579 : vector<8x2xf32>
    %cst_106 = arith.constant 1.000000e+00 : f32
    %581 = vector.broadcast %cst_106 : f32 to vector<8x2xf32>
    %582 = arith.addf %581, %580 : vector<8x2xf32>
    %583 = arith.divf %581, %582 : vector<8x2xf32>
    %584 = arith.mulf %561, %529 : vector<8x2xf32>
    %585 = arith.mulf %548, %570 : vector<8x2xf32>
    %586 = arith.addf %584, %585 : vector<8x2xf32>
    %587 = math.tanh %586 : vector<8x2xf32>
    %588 = arith.mulf %583, %587 : vector<8x2xf32>
    %589 = vector.broadcast %c6_i32 : i32 to vector<8x1xi32>
    %590 = arith.cmpi sge, %589, %40 : vector<8x1xi32>
    %591 = vector.broadcast %c6_i32 : i32 to vector<8x1xi32>
    %592 = arith.subi %591, %40 : vector<8x1xi32>
    %c8_i32_107 = arith.constant 8 : i32
    %593 = vector.broadcast %c8_i32_107 : i32 to vector<8x1xi32>
    %594 = arith.cmpi slt, %592, %593 : vector<8x1xi32>
    %595 = arith.andi %590, %594 : vector<8x1xi1>
    %596 = vector.shape_cast %595 : vector<8x1xi1> to vector<8x1xi1>
    %597 = vector.broadcast %596 : vector<8x1xi1> to vector<8x2xi1>
    %598 = arith.select %597, %588, %526 : vector<8x2xi1>, vector<8x2xf32>
    %599 = vector.shape_cast %595 : vector<8x1xi1> to vector<8x1xi1>
    %600 = vector.broadcast %599 : vector<8x1xi1> to vector<8x2xi1>
    %601 = arith.select %600, %586, %529 : vector<8x2xi1>, vector<8x2xf32>
    %c7_i32_108 = arith.constant 7 : i32
    %c7_i32_109 = arith.constant 7 : i32
    %602 = arith.minsi %c7_i32_108, %c7_i32_109 : i32
    %603 = arith.index_cast %602 : i32 to index
    %c0_110 = arith.constant 0 : index
    %c0_111 = arith.constant 0 : index
    %604 = vector.load %arg4[%603, %c0_110, %c0_111] : memref<8x4x2xf32, #tpu.memory_space<vmem>>, vector<1x4x2xf32>
    %605 = vector.shape_cast %604 : vector<1x4x2xf32> to vector<4x2xf32>
    %606 = vector.extract_strided_slice %598 {offsets = [0, 0], sizes = [7, 2], strides = [1, 1]} : vector<8x2xf32> to vector<7x2xf32>
    %607 = tpu.concatenate %47, %606 in 0 : vector<1x2xf32>, vector<7x2xf32> -> vector<8x2xf32>
    %608 = arith.mulf %6, %607 : vector<8x2xf32>
    %609 = arith.mulf %18, %598 : vector<8x2xf32>
    %610 = arith.addf %608, %609 : vector<8x2xf32>
    %611 = arith.addf %610, %30 : vector<8x2xf32>
    %612 = vector.extract_strided_slice %605 {offsets = [0, 0], sizes = [1, 2], strides = [1, 1]} : vector<4x2xf32> to vector<1x2xf32>
    %613 = vector.broadcast %612 : vector<1x2xf32> to vector<8x2xf32>
    %614 = arith.mulf %46, %613 : vector<8x2xf32>
    %615 = arith.addf %611, %614 : vector<8x2xf32>
    %616 = arith.negf %615 : vector<8x2xf32>
    %617 = math.exp %616 : vector<8x2xf32>
    %cst_112 = arith.constant 1.000000e+00 : f32
    %618 = vector.broadcast %cst_112 : f32 to vector<8x2xf32>
    %619 = arith.addf %618, %617 : vector<8x2xf32>
    %620 = arith.divf %618, %619 : vector<8x2xf32>
    %621 = arith.mulf %9, %607 : vector<8x2xf32>
    %622 = arith.mulf %21, %598 : vector<8x2xf32>
    %623 = arith.addf %621, %622 : vector<8x2xf32>
    %624 = arith.addf %623, %33 : vector<8x2xf32>
    %625 = vector.extract_strided_slice %605 {offsets = [1, 0], sizes = [1, 2], strides = [1, 1]} : vector<4x2xf32> to vector<1x2xf32>
    %626 = vector.broadcast %625 : vector<1x2xf32> to vector<8x2xf32>
    %627 = arith.mulf %46, %626 : vector<8x2xf32>
    %628 = arith.addf %624, %627 : vector<8x2xf32>
    %629 = arith.negf %628 : vector<8x2xf32>
    %630 = math.exp %629 : vector<8x2xf32>
    %cst_113 = arith.constant 1.000000e+00 : f32
    %631 = vector.broadcast %cst_113 : f32 to vector<8x2xf32>
    %632 = arith.addf %631, %630 : vector<8x2xf32>
    %633 = arith.divf %631, %632 : vector<8x2xf32>
    %634 = arith.mulf %12, %607 : vector<8x2xf32>
    %635 = arith.mulf %24, %598 : vector<8x2xf32>
    %636 = arith.addf %634, %635 : vector<8x2xf32>
    %637 = arith.addf %636, %36 : vector<8x2xf32>
    %638 = vector.extract_strided_slice %605 {offsets = [2, 0], sizes = [1, 2], strides = [1, 1]} : vector<4x2xf32> to vector<1x2xf32>
    %639 = vector.broadcast %638 : vector<1x2xf32> to vector<8x2xf32>
    %640 = arith.mulf %46, %639 : vector<8x2xf32>
    %641 = arith.addf %637, %640 : vector<8x2xf32>
    %642 = math.tanh %641 : vector<8x2xf32>
    %643 = arith.mulf %15, %607 : vector<8x2xf32>
    %644 = arith.mulf %27, %598 : vector<8x2xf32>
    %645 = arith.addf %643, %644 : vector<8x2xf32>
    %646 = arith.addf %645, %39 : vector<8x2xf32>
    %647 = vector.extract_strided_slice %605 {offsets = [3, 0], sizes = [1, 2], strides = [1, 1]} : vector<4x2xf32> to vector<1x2xf32>
    %648 = vector.broadcast %647 : vector<1x2xf32> to vector<8x2xf32>
    %649 = arith.mulf %46, %648 : vector<8x2xf32>
    %650 = arith.addf %646, %649 : vector<8x2xf32>
    %651 = arith.negf %650 : vector<8x2xf32>
    %652 = math.exp %651 : vector<8x2xf32>
    %cst_114 = arith.constant 1.000000e+00 : f32
    %653 = vector.broadcast %cst_114 : f32 to vector<8x2xf32>
    %654 = arith.addf %653, %652 : vector<8x2xf32>
    %655 = arith.divf %653, %654 : vector<8x2xf32>
    %656 = arith.mulf %633, %601 : vector<8x2xf32>
    %657 = arith.mulf %620, %642 : vector<8x2xf32>
    %658 = arith.addf %656, %657 : vector<8x2xf32>
    %659 = math.tanh %658 : vector<8x2xf32>
    %660 = arith.mulf %655, %659 : vector<8x2xf32>
    %661 = vector.broadcast %c7_i32_108 : i32 to vector<8x1xi32>
    %662 = arith.cmpi sge, %661, %40 : vector<8x1xi32>
    %663 = vector.broadcast %c7_i32_108 : i32 to vector<8x1xi32>
    %664 = arith.subi %663, %40 : vector<8x1xi32>
    %c8_i32_115 = arith.constant 8 : i32
    %665 = vector.broadcast %c8_i32_115 : i32 to vector<8x1xi32>
    %666 = arith.cmpi slt, %664, %665 : vector<8x1xi32>
    %667 = arith.andi %662, %666 : vector<8x1xi1>
    %668 = vector.shape_cast %667 : vector<8x1xi1> to vector<8x1xi1>
    %669 = vector.broadcast %668 : vector<8x1xi1> to vector<8x2xi1>
    %670 = arith.select %669, %660, %598 : vector<8x2xi1>, vector<8x2xf32>
    %671 = vector.shape_cast %667 : vector<8x1xi1> to vector<8x1xi1>
    %672 = vector.broadcast %671 : vector<8x1xi1> to vector<8x2xi1>
    %673 = arith.select %672, %658, %601 : vector<8x2xi1>, vector<8x2xf32>
    %c8_i32_116 = arith.constant 8 : i32
    %c7_i32_117 = arith.constant 7 : i32
    %674 = arith.minsi %c8_i32_116, %c7_i32_117 : i32
    %675 = arith.index_cast %674 : i32 to index
    %c0_118 = arith.constant 0 : index
    %c0_119 = arith.constant 0 : index
    %676 = vector.load %arg4[%675, %c0_118, %c0_119] : memref<8x4x2xf32, #tpu.memory_space<vmem>>, vector<1x4x2xf32>
    %677 = vector.shape_cast %676 : vector<1x4x2xf32> to vector<4x2xf32>
    %678 = vector.extract_strided_slice %670 {offsets = [0, 0], sizes = [7, 2], strides = [1, 1]} : vector<8x2xf32> to vector<7x2xf32>
    %679 = tpu.concatenate %47, %678 in 0 : vector<1x2xf32>, vector<7x2xf32> -> vector<8x2xf32>
    %680 = arith.mulf %6, %679 : vector<8x2xf32>
    %681 = arith.mulf %18, %670 : vector<8x2xf32>
    %682 = arith.addf %680, %681 : vector<8x2xf32>
    %683 = arith.addf %682, %30 : vector<8x2xf32>
    %684 = vector.extract_strided_slice %677 {offsets = [0, 0], sizes = [1, 2], strides = [1, 1]} : vector<4x2xf32> to vector<1x2xf32>
    %685 = vector.broadcast %684 : vector<1x2xf32> to vector<8x2xf32>
    %686 = arith.mulf %46, %685 : vector<8x2xf32>
    %687 = arith.addf %683, %686 : vector<8x2xf32>
    %688 = arith.negf %687 : vector<8x2xf32>
    %689 = math.exp %688 : vector<8x2xf32>
    %cst_120 = arith.constant 1.000000e+00 : f32
    %690 = vector.broadcast %cst_120 : f32 to vector<8x2xf32>
    %691 = arith.addf %690, %689 : vector<8x2xf32>
    %692 = arith.divf %690, %691 : vector<8x2xf32>
    %693 = arith.mulf %9, %679 : vector<8x2xf32>
    %694 = arith.mulf %21, %670 : vector<8x2xf32>
    %695 = arith.addf %693, %694 : vector<8x2xf32>
    %696 = arith.addf %695, %33 : vector<8x2xf32>
    %697 = vector.extract_strided_slice %677 {offsets = [1, 0], sizes = [1, 2], strides = [1, 1]} : vector<4x2xf32> to vector<1x2xf32>
    %698 = vector.broadcast %697 : vector<1x2xf32> to vector<8x2xf32>
    %699 = arith.mulf %46, %698 : vector<8x2xf32>
    %700 = arith.addf %696, %699 : vector<8x2xf32>
    %701 = arith.negf %700 : vector<8x2xf32>
    %702 = math.exp %701 : vector<8x2xf32>
    %cst_121 = arith.constant 1.000000e+00 : f32
    %703 = vector.broadcast %cst_121 : f32 to vector<8x2xf32>
    %704 = arith.addf %703, %702 : vector<8x2xf32>
    %705 = arith.divf %703, %704 : vector<8x2xf32>
    %706 = arith.mulf %12, %679 : vector<8x2xf32>
    %707 = arith.mulf %24, %670 : vector<8x2xf32>
    %708 = arith.addf %706, %707 : vector<8x2xf32>
    %709 = arith.addf %708, %36 : vector<8x2xf32>
    %710 = vector.extract_strided_slice %677 {offsets = [2, 0], sizes = [1, 2], strides = [1, 1]} : vector<4x2xf32> to vector<1x2xf32>
    %711 = vector.broadcast %710 : vector<1x2xf32> to vector<8x2xf32>
    %712 = arith.mulf %46, %711 : vector<8x2xf32>
    %713 = arith.addf %709, %712 : vector<8x2xf32>
    %714 = math.tanh %713 : vector<8x2xf32>
    %715 = arith.mulf %15, %679 : vector<8x2xf32>
    %716 = arith.mulf %27, %670 : vector<8x2xf32>
    %717 = arith.addf %715, %716 : vector<8x2xf32>
    %718 = arith.addf %717, %39 : vector<8x2xf32>
    %719 = vector.extract_strided_slice %677 {offsets = [3, 0], sizes = [1, 2], strides = [1, 1]} : vector<4x2xf32> to vector<1x2xf32>
    %720 = vector.broadcast %719 : vector<1x2xf32> to vector<8x2xf32>
    %721 = arith.mulf %46, %720 : vector<8x2xf32>
    %722 = arith.addf %718, %721 : vector<8x2xf32>
    %723 = arith.negf %722 : vector<8x2xf32>
    %724 = math.exp %723 : vector<8x2xf32>
    %cst_122 = arith.constant 1.000000e+00 : f32
    %725 = vector.broadcast %cst_122 : f32 to vector<8x2xf32>
    %726 = arith.addf %725, %724 : vector<8x2xf32>
    %727 = arith.divf %725, %726 : vector<8x2xf32>
    %728 = arith.mulf %705, %673 : vector<8x2xf32>
    %729 = arith.mulf %692, %714 : vector<8x2xf32>
    %730 = arith.addf %728, %729 : vector<8x2xf32>
    %731 = math.tanh %730 : vector<8x2xf32>
    %732 = arith.mulf %727, %731 : vector<8x2xf32>
    %733 = vector.broadcast %c8_i32_116 : i32 to vector<8x1xi32>
    %734 = arith.cmpi sge, %733, %40 : vector<8x1xi32>
    %735 = vector.broadcast %c8_i32_116 : i32 to vector<8x1xi32>
    %736 = arith.subi %735, %40 : vector<8x1xi32>
    %c8_i32_123 = arith.constant 8 : i32
    %737 = vector.broadcast %c8_i32_123 : i32 to vector<8x1xi32>
    %738 = arith.cmpi slt, %736, %737 : vector<8x1xi32>
    %739 = arith.andi %734, %738 : vector<8x1xi1>
    %740 = vector.shape_cast %739 : vector<8x1xi1> to vector<8x1xi1>
    %741 = vector.broadcast %740 : vector<8x1xi1> to vector<8x2xi1>
    %742 = arith.select %741, %732, %670 : vector<8x2xi1>, vector<8x2xf32>
    %743 = vector.shape_cast %739 : vector<8x1xi1> to vector<8x1xi1>
    %744 = vector.broadcast %743 : vector<8x1xi1> to vector<8x2xi1>
    %745 = arith.select %744, %730, %673 : vector<8x2xi1>, vector<8x2xf32>
    %c9_i32 = arith.constant 9 : i32
    %c7_i32_124 = arith.constant 7 : i32
    %746 = arith.minsi %c9_i32, %c7_i32_124 : i32
    %747 = arith.index_cast %746 : i32 to index
    %c0_125 = arith.constant 0 : index
    %c0_126 = arith.constant 0 : index
    %748 = vector.load %arg4[%747, %c0_125, %c0_126] : memref<8x4x2xf32, #tpu.memory_space<vmem>>, vector<1x4x2xf32>
    %749 = vector.shape_cast %748 : vector<1x4x2xf32> to vector<4x2xf32>
    %750 = vector.extract_strided_slice %742 {offsets = [0, 0], sizes = [7, 2], strides = [1, 1]} : vector<8x2xf32> to vector<7x2xf32>
    %751 = tpu.concatenate %47, %750 in 0 : vector<1x2xf32>, vector<7x2xf32> -> vector<8x2xf32>
    %752 = arith.mulf %6, %751 : vector<8x2xf32>
    %753 = arith.mulf %18, %742 : vector<8x2xf32>
    %754 = arith.addf %752, %753 : vector<8x2xf32>
    %755 = arith.addf %754, %30 : vector<8x2xf32>
    %756 = vector.extract_strided_slice %749 {offsets = [0, 0], sizes = [1, 2], strides = [1, 1]} : vector<4x2xf32> to vector<1x2xf32>
    %757 = vector.broadcast %756 : vector<1x2xf32> to vector<8x2xf32>
    %758 = arith.mulf %46, %757 : vector<8x2xf32>
    %759 = arith.addf %755, %758 : vector<8x2xf32>
    %760 = arith.negf %759 : vector<8x2xf32>
    %761 = math.exp %760 : vector<8x2xf32>
    %cst_127 = arith.constant 1.000000e+00 : f32
    %762 = vector.broadcast %cst_127 : f32 to vector<8x2xf32>
    %763 = arith.addf %762, %761 : vector<8x2xf32>
    %764 = arith.divf %762, %763 : vector<8x2xf32>
    %765 = arith.mulf %9, %751 : vector<8x2xf32>
    %766 = arith.mulf %21, %742 : vector<8x2xf32>
    %767 = arith.addf %765, %766 : vector<8x2xf32>
    %768 = arith.addf %767, %33 : vector<8x2xf32>
    %769 = vector.extract_strided_slice %749 {offsets = [1, 0], sizes = [1, 2], strides = [1, 1]} : vector<4x2xf32> to vector<1x2xf32>
    %770 = vector.broadcast %769 : vector<1x2xf32> to vector<8x2xf32>
    %771 = arith.mulf %46, %770 : vector<8x2xf32>
    %772 = arith.addf %768, %771 : vector<8x2xf32>
    %773 = arith.negf %772 : vector<8x2xf32>
    %774 = math.exp %773 : vector<8x2xf32>
    %cst_128 = arith.constant 1.000000e+00 : f32
    %775 = vector.broadcast %cst_128 : f32 to vector<8x2xf32>
    %776 = arith.addf %775, %774 : vector<8x2xf32>
    %777 = arith.divf %775, %776 : vector<8x2xf32>
    %778 = arith.mulf %12, %751 : vector<8x2xf32>
    %779 = arith.mulf %24, %742 : vector<8x2xf32>
    %780 = arith.addf %778, %779 : vector<8x2xf32>
    %781 = arith.addf %780, %36 : vector<8x2xf32>
    %782 = vector.extract_strided_slice %749 {offsets = [2, 0], sizes = [1, 2], strides = [1, 1]} : vector<4x2xf32> to vector<1x2xf32>
    %783 = vector.broadcast %782 : vector<1x2xf32> to vector<8x2xf32>
    %784 = arith.mulf %46, %783 : vector<8x2xf32>
    %785 = arith.addf %781, %784 : vector<8x2xf32>
    %786 = math.tanh %785 : vector<8x2xf32>
    %787 = arith.mulf %15, %751 : vector<8x2xf32>
    %788 = arith.mulf %27, %742 : vector<8x2xf32>
    %789 = arith.addf %787, %788 : vector<8x2xf32>
    %790 = arith.addf %789, %39 : vector<8x2xf32>
    %791 = vector.extract_strided_slice %749 {offsets = [3, 0], sizes = [1, 2], strides = [1, 1]} : vector<4x2xf32> to vector<1x2xf32>
    %792 = vector.broadcast %791 : vector<1x2xf32> to vector<8x2xf32>
    %793 = arith.mulf %46, %792 : vector<8x2xf32>
    %794 = arith.addf %790, %793 : vector<8x2xf32>
    %795 = arith.negf %794 : vector<8x2xf32>
    %796 = math.exp %795 : vector<8x2xf32>
    %cst_129 = arith.constant 1.000000e+00 : f32
    %797 = vector.broadcast %cst_129 : f32 to vector<8x2xf32>
    %798 = arith.addf %797, %796 : vector<8x2xf32>
    %799 = arith.divf %797, %798 : vector<8x2xf32>
    %800 = arith.mulf %777, %745 : vector<8x2xf32>
    %801 = arith.mulf %764, %786 : vector<8x2xf32>
    %802 = arith.addf %800, %801 : vector<8x2xf32>
    %803 = math.tanh %802 : vector<8x2xf32>
    %804 = arith.mulf %799, %803 : vector<8x2xf32>
    %805 = vector.broadcast %c9_i32 : i32 to vector<8x1xi32>
    %806 = arith.cmpi sge, %805, %40 : vector<8x1xi32>
    %807 = vector.broadcast %c9_i32 : i32 to vector<8x1xi32>
    %808 = arith.subi %807, %40 : vector<8x1xi32>
    %c8_i32_130 = arith.constant 8 : i32
    %809 = vector.broadcast %c8_i32_130 : i32 to vector<8x1xi32>
    %810 = arith.cmpi slt, %808, %809 : vector<8x1xi32>
    %811 = arith.andi %806, %810 : vector<8x1xi1>
    %812 = vector.shape_cast %811 : vector<8x1xi1> to vector<8x1xi1>
    %813 = vector.broadcast %812 : vector<8x1xi1> to vector<8x2xi1>
    %814 = arith.select %813, %804, %742 : vector<8x2xi1>, vector<8x2xf32>
    %815 = vector.shape_cast %811 : vector<8x1xi1> to vector<8x1xi1>
    %816 = vector.broadcast %815 : vector<8x1xi1> to vector<8x2xi1>
    %817 = arith.select %816, %802, %745 : vector<8x2xi1>, vector<8x2xf32>
    %c10_i32 = arith.constant 10 : i32
    %c7_i32_131 = arith.constant 7 : i32
    %818 = arith.minsi %c10_i32, %c7_i32_131 : i32
    %819 = arith.index_cast %818 : i32 to index
    %c0_132 = arith.constant 0 : index
    %c0_133 = arith.constant 0 : index
    %820 = vector.load %arg4[%819, %c0_132, %c0_133] : memref<8x4x2xf32, #tpu.memory_space<vmem>>, vector<1x4x2xf32>
    %821 = vector.shape_cast %820 : vector<1x4x2xf32> to vector<4x2xf32>
    %822 = vector.extract_strided_slice %814 {offsets = [0, 0], sizes = [7, 2], strides = [1, 1]} : vector<8x2xf32> to vector<7x2xf32>
    %823 = tpu.concatenate %47, %822 in 0 : vector<1x2xf32>, vector<7x2xf32> -> vector<8x2xf32>
    %824 = arith.mulf %6, %823 : vector<8x2xf32>
    %825 = arith.mulf %18, %814 : vector<8x2xf32>
    %826 = arith.addf %824, %825 : vector<8x2xf32>
    %827 = arith.addf %826, %30 : vector<8x2xf32>
    %828 = vector.extract_strided_slice %821 {offsets = [0, 0], sizes = [1, 2], strides = [1, 1]} : vector<4x2xf32> to vector<1x2xf32>
    %829 = vector.broadcast %828 : vector<1x2xf32> to vector<8x2xf32>
    %830 = arith.mulf %46, %829 : vector<8x2xf32>
    %831 = arith.addf %827, %830 : vector<8x2xf32>
    %832 = arith.negf %831 : vector<8x2xf32>
    %833 = math.exp %832 : vector<8x2xf32>
    %cst_134 = arith.constant 1.000000e+00 : f32
    %834 = vector.broadcast %cst_134 : f32 to vector<8x2xf32>
    %835 = arith.addf %834, %833 : vector<8x2xf32>
    %836 = arith.divf %834, %835 : vector<8x2xf32>
    %837 = arith.mulf %9, %823 : vector<8x2xf32>
    %838 = arith.mulf %21, %814 : vector<8x2xf32>
    %839 = arith.addf %837, %838 : vector<8x2xf32>
    %840 = arith.addf %839, %33 : vector<8x2xf32>
    %841 = vector.extract_strided_slice %821 {offsets = [1, 0], sizes = [1, 2], strides = [1, 1]} : vector<4x2xf32> to vector<1x2xf32>
    %842 = vector.broadcast %841 : vector<1x2xf32> to vector<8x2xf32>
    %843 = arith.mulf %46, %842 : vector<8x2xf32>
    %844 = arith.addf %840, %843 : vector<8x2xf32>
    %845 = arith.negf %844 : vector<8x2xf32>
    %846 = math.exp %845 : vector<8x2xf32>
    %cst_135 = arith.constant 1.000000e+00 : f32
    %847 = vector.broadcast %cst_135 : f32 to vector<8x2xf32>
    %848 = arith.addf %847, %846 : vector<8x2xf32>
    %849 = arith.divf %847, %848 : vector<8x2xf32>
    %850 = arith.mulf %12, %823 : vector<8x2xf32>
    %851 = arith.mulf %24, %814 : vector<8x2xf32>
    %852 = arith.addf %850, %851 : vector<8x2xf32>
    %853 = arith.addf %852, %36 : vector<8x2xf32>
    %854 = vector.extract_strided_slice %821 {offsets = [2, 0], sizes = [1, 2], strides = [1, 1]} : vector<4x2xf32> to vector<1x2xf32>
    %855 = vector.broadcast %854 : vector<1x2xf32> to vector<8x2xf32>
    %856 = arith.mulf %46, %855 : vector<8x2xf32>
    %857 = arith.addf %853, %856 : vector<8x2xf32>
    %858 = math.tanh %857 : vector<8x2xf32>
    %859 = arith.mulf %15, %823 : vector<8x2xf32>
    %860 = arith.mulf %27, %814 : vector<8x2xf32>
    %861 = arith.addf %859, %860 : vector<8x2xf32>
    %862 = arith.addf %861, %39 : vector<8x2xf32>
    %863 = vector.extract_strided_slice %821 {offsets = [3, 0], sizes = [1, 2], strides = [1, 1]} : vector<4x2xf32> to vector<1x2xf32>
    %864 = vector.broadcast %863 : vector<1x2xf32> to vector<8x2xf32>
    %865 = arith.mulf %46, %864 : vector<8x2xf32>
    %866 = arith.addf %862, %865 : vector<8x2xf32>
    %867 = arith.negf %866 : vector<8x2xf32>
    %868 = math.exp %867 : vector<8x2xf32>
    %cst_136 = arith.constant 1.000000e+00 : f32
    %869 = vector.broadcast %cst_136 : f32 to vector<8x2xf32>
    %870 = arith.addf %869, %868 : vector<8x2xf32>
    %871 = arith.divf %869, %870 : vector<8x2xf32>
    %872 = arith.mulf %849, %817 : vector<8x2xf32>
    %873 = arith.mulf %836, %858 : vector<8x2xf32>
    %874 = arith.addf %872, %873 : vector<8x2xf32>
    %875 = math.tanh %874 : vector<8x2xf32>
    %876 = arith.mulf %871, %875 : vector<8x2xf32>
    %877 = vector.broadcast %c10_i32 : i32 to vector<8x1xi32>
    %878 = arith.cmpi sge, %877, %40 : vector<8x1xi32>
    %879 = vector.broadcast %c10_i32 : i32 to vector<8x1xi32>
    %880 = arith.subi %879, %40 : vector<8x1xi32>
    %c8_i32_137 = arith.constant 8 : i32
    %881 = vector.broadcast %c8_i32_137 : i32 to vector<8x1xi32>
    %882 = arith.cmpi slt, %880, %881 : vector<8x1xi32>
    %883 = arith.andi %878, %882 : vector<8x1xi1>
    %884 = vector.shape_cast %883 : vector<8x1xi1> to vector<8x1xi1>
    %885 = vector.broadcast %884 : vector<8x1xi1> to vector<8x2xi1>
    %886 = arith.select %885, %876, %814 : vector<8x2xi1>, vector<8x2xf32>
    %887 = vector.shape_cast %883 : vector<8x1xi1> to vector<8x1xi1>
    %888 = vector.broadcast %887 : vector<8x1xi1> to vector<8x2xi1>
    %889 = arith.select %888, %874, %817 : vector<8x2xi1>, vector<8x2xf32>
    %c11_i32 = arith.constant 11 : i32
    %c7_i32_138 = arith.constant 7 : i32
    %890 = arith.minsi %c11_i32, %c7_i32_138 : i32
    %891 = arith.index_cast %890 : i32 to index
    %c0_139 = arith.constant 0 : index
    %c0_140 = arith.constant 0 : index
    %892 = vector.load %arg4[%891, %c0_139, %c0_140] : memref<8x4x2xf32, #tpu.memory_space<vmem>>, vector<1x4x2xf32>
    %893 = vector.shape_cast %892 : vector<1x4x2xf32> to vector<4x2xf32>
    %894 = vector.extract_strided_slice %886 {offsets = [0, 0], sizes = [7, 2], strides = [1, 1]} : vector<8x2xf32> to vector<7x2xf32>
    %895 = tpu.concatenate %47, %894 in 0 : vector<1x2xf32>, vector<7x2xf32> -> vector<8x2xf32>
    %896 = arith.mulf %6, %895 : vector<8x2xf32>
    %897 = arith.mulf %18, %886 : vector<8x2xf32>
    %898 = arith.addf %896, %897 : vector<8x2xf32>
    %899 = arith.addf %898, %30 : vector<8x2xf32>
    %900 = vector.extract_strided_slice %893 {offsets = [0, 0], sizes = [1, 2], strides = [1, 1]} : vector<4x2xf32> to vector<1x2xf32>
    %901 = vector.broadcast %900 : vector<1x2xf32> to vector<8x2xf32>
    %902 = arith.mulf %46, %901 : vector<8x2xf32>
    %903 = arith.addf %899, %902 : vector<8x2xf32>
    %904 = arith.negf %903 : vector<8x2xf32>
    %905 = math.exp %904 : vector<8x2xf32>
    %cst_141 = arith.constant 1.000000e+00 : f32
    %906 = vector.broadcast %cst_141 : f32 to vector<8x2xf32>
    %907 = arith.addf %906, %905 : vector<8x2xf32>
    %908 = arith.divf %906, %907 : vector<8x2xf32>
    %909 = arith.mulf %9, %895 : vector<8x2xf32>
    %910 = arith.mulf %21, %886 : vector<8x2xf32>
    %911 = arith.addf %909, %910 : vector<8x2xf32>
    %912 = arith.addf %911, %33 : vector<8x2xf32>
    %913 = vector.extract_strided_slice %893 {offsets = [1, 0], sizes = [1, 2], strides = [1, 1]} : vector<4x2xf32> to vector<1x2xf32>
    %914 = vector.broadcast %913 : vector<1x2xf32> to vector<8x2xf32>
    %915 = arith.mulf %46, %914 : vector<8x2xf32>
    %916 = arith.addf %912, %915 : vector<8x2xf32>
    %917 = arith.negf %916 : vector<8x2xf32>
    %918 = math.exp %917 : vector<8x2xf32>
    %cst_142 = arith.constant 1.000000e+00 : f32
    %919 = vector.broadcast %cst_142 : f32 to vector<8x2xf32>
    %920 = arith.addf %919, %918 : vector<8x2xf32>
    %921 = arith.divf %919, %920 : vector<8x2xf32>
    %922 = arith.mulf %12, %895 : vector<8x2xf32>
    %923 = arith.mulf %24, %886 : vector<8x2xf32>
    %924 = arith.addf %922, %923 : vector<8x2xf32>
    %925 = arith.addf %924, %36 : vector<8x2xf32>
    %926 = vector.extract_strided_slice %893 {offsets = [2, 0], sizes = [1, 2], strides = [1, 1]} : vector<4x2xf32> to vector<1x2xf32>
    %927 = vector.broadcast %926 : vector<1x2xf32> to vector<8x2xf32>
    %928 = arith.mulf %46, %927 : vector<8x2xf32>
    %929 = arith.addf %925, %928 : vector<8x2xf32>
    %930 = math.tanh %929 : vector<8x2xf32>
    %931 = arith.mulf %15, %895 : vector<8x2xf32>
    %932 = arith.mulf %27, %886 : vector<8x2xf32>
    %933 = arith.addf %931, %932 : vector<8x2xf32>
    %934 = arith.addf %933, %39 : vector<8x2xf32>
    %935 = vector.extract_strided_slice %893 {offsets = [3, 0], sizes = [1, 2], strides = [1, 1]} : vector<4x2xf32> to vector<1x2xf32>
    %936 = vector.broadcast %935 : vector<1x2xf32> to vector<8x2xf32>
    %937 = arith.mulf %46, %936 : vector<8x2xf32>
    %938 = arith.addf %934, %937 : vector<8x2xf32>
    %939 = arith.negf %938 : vector<8x2xf32>
    %940 = math.exp %939 : vector<8x2xf32>
    %cst_143 = arith.constant 1.000000e+00 : f32
    %941 = vector.broadcast %cst_143 : f32 to vector<8x2xf32>
    %942 = arith.addf %941, %940 : vector<8x2xf32>
    %943 = arith.divf %941, %942 : vector<8x2xf32>
    %944 = arith.mulf %921, %889 : vector<8x2xf32>
    %945 = arith.mulf %908, %930 : vector<8x2xf32>
    %946 = arith.addf %944, %945 : vector<8x2xf32>
    %947 = math.tanh %946 : vector<8x2xf32>
    %948 = arith.mulf %943, %947 : vector<8x2xf32>
    %949 = vector.broadcast %c11_i32 : i32 to vector<8x1xi32>
    %950 = arith.cmpi sge, %949, %40 : vector<8x1xi32>
    %951 = vector.broadcast %c11_i32 : i32 to vector<8x1xi32>
    %952 = arith.subi %951, %40 : vector<8x1xi32>
    %c8_i32_144 = arith.constant 8 : i32
    %953 = vector.broadcast %c8_i32_144 : i32 to vector<8x1xi32>
    %954 = arith.cmpi slt, %952, %953 : vector<8x1xi32>
    %955 = arith.andi %950, %954 : vector<8x1xi1>
    %956 = vector.shape_cast %955 : vector<8x1xi1> to vector<8x1xi1>
    %957 = vector.broadcast %956 : vector<8x1xi1> to vector<8x2xi1>
    %958 = arith.select %957, %948, %886 : vector<8x2xi1>, vector<8x2xf32>
    %959 = vector.shape_cast %955 : vector<8x1xi1> to vector<8x1xi1>
    %960 = vector.broadcast %959 : vector<8x1xi1> to vector<8x2xi1>
    %961 = arith.select %960, %946, %889 : vector<8x2xi1>, vector<8x2xf32>
    %c12_i32 = arith.constant 12 : i32
    %c7_i32_145 = arith.constant 7 : i32
    %962 = arith.minsi %c12_i32, %c7_i32_145 : i32
    %963 = arith.index_cast %962 : i32 to index
    %c0_146 = arith.constant 0 : index
    %c0_147 = arith.constant 0 : index
    %964 = vector.load %arg4[%963, %c0_146, %c0_147] : memref<8x4x2xf32, #tpu.memory_space<vmem>>, vector<1x4x2xf32>
    %965 = vector.shape_cast %964 : vector<1x4x2xf32> to vector<4x2xf32>
    %966 = vector.extract_strided_slice %958 {offsets = [0, 0], sizes = [7, 2], strides = [1, 1]} : vector<8x2xf32> to vector<7x2xf32>
    %967 = tpu.concatenate %47, %966 in 0 : vector<1x2xf32>, vector<7x2xf32> -> vector<8x2xf32>
    %968 = arith.mulf %6, %967 : vector<8x2xf32>
    %969 = arith.mulf %18, %958 : vector<8x2xf32>
    %970 = arith.addf %968, %969 : vector<8x2xf32>
    %971 = arith.addf %970, %30 : vector<8x2xf32>
    %972 = vector.extract_strided_slice %965 {offsets = [0, 0], sizes = [1, 2], strides = [1, 1]} : vector<4x2xf32> to vector<1x2xf32>
    %973 = vector.broadcast %972 : vector<1x2xf32> to vector<8x2xf32>
    %974 = arith.mulf %46, %973 : vector<8x2xf32>
    %975 = arith.addf %971, %974 : vector<8x2xf32>
    %976 = arith.negf %975 : vector<8x2xf32>
    %977 = math.exp %976 : vector<8x2xf32>
    %cst_148 = arith.constant 1.000000e+00 : f32
    %978 = vector.broadcast %cst_148 : f32 to vector<8x2xf32>
    %979 = arith.addf %978, %977 : vector<8x2xf32>
    %980 = arith.divf %978, %979 : vector<8x2xf32>
    %981 = arith.mulf %9, %967 : vector<8x2xf32>
    %982 = arith.mulf %21, %958 : vector<8x2xf32>
    %983 = arith.addf %981, %982 : vector<8x2xf32>
    %984 = arith.addf %983, %33 : vector<8x2xf32>
    %985 = vector.extract_strided_slice %965 {offsets = [1, 0], sizes = [1, 2], strides = [1, 1]} : vector<4x2xf32> to vector<1x2xf32>
    %986 = vector.broadcast %985 : vector<1x2xf32> to vector<8x2xf32>
    %987 = arith.mulf %46, %986 : vector<8x2xf32>
    %988 = arith.addf %984, %987 : vector<8x2xf32>
    %989 = arith.negf %988 : vector<8x2xf32>
    %990 = math.exp %989 : vector<8x2xf32>
    %cst_149 = arith.constant 1.000000e+00 : f32
    %991 = vector.broadcast %cst_149 : f32 to vector<8x2xf32>
    %992 = arith.addf %991, %990 : vector<8x2xf32>
    %993 = arith.divf %991, %992 : vector<8x2xf32>
    %994 = arith.mulf %12, %967 : vector<8x2xf32>
    %995 = arith.mulf %24, %958 : vector<8x2xf32>
    %996 = arith.addf %994, %995 : vector<8x2xf32>
    %997 = arith.addf %996, %36 : vector<8x2xf32>
    %998 = vector.extract_strided_slice %965 {offsets = [2, 0], sizes = [1, 2], strides = [1, 1]} : vector<4x2xf32> to vector<1x2xf32>
    %999 = vector.broadcast %998 : vector<1x2xf32> to vector<8x2xf32>
    %1000 = arith.mulf %46, %999 : vector<8x2xf32>
    %1001 = arith.addf %997, %1000 : vector<8x2xf32>
    %1002 = math.tanh %1001 : vector<8x2xf32>
    %1003 = arith.mulf %15, %967 : vector<8x2xf32>
    %1004 = arith.mulf %27, %958 : vector<8x2xf32>
    %1005 = arith.addf %1003, %1004 : vector<8x2xf32>
    %1006 = arith.addf %1005, %39 : vector<8x2xf32>
    %1007 = vector.extract_strided_slice %965 {offsets = [3, 0], sizes = [1, 2], strides = [1, 1]} : vector<4x2xf32> to vector<1x2xf32>
    %1008 = vector.broadcast %1007 : vector<1x2xf32> to vector<8x2xf32>
    %1009 = arith.mulf %46, %1008 : vector<8x2xf32>
    %1010 = arith.addf %1006, %1009 : vector<8x2xf32>
    %1011 = arith.negf %1010 : vector<8x2xf32>
    %1012 = math.exp %1011 : vector<8x2xf32>
    %cst_150 = arith.constant 1.000000e+00 : f32
    %1013 = vector.broadcast %cst_150 : f32 to vector<8x2xf32>
    %1014 = arith.addf %1013, %1012 : vector<8x2xf32>
    %1015 = arith.divf %1013, %1014 : vector<8x2xf32>
    %1016 = arith.mulf %993, %961 : vector<8x2xf32>
    %1017 = arith.mulf %980, %1002 : vector<8x2xf32>
    %1018 = arith.addf %1016, %1017 : vector<8x2xf32>
    %1019 = math.tanh %1018 : vector<8x2xf32>
    %1020 = arith.mulf %1015, %1019 : vector<8x2xf32>
    %1021 = vector.broadcast %c12_i32 : i32 to vector<8x1xi32>
    %1022 = arith.cmpi sge, %1021, %40 : vector<8x1xi32>
    %1023 = vector.broadcast %c12_i32 : i32 to vector<8x1xi32>
    %1024 = arith.subi %1023, %40 : vector<8x1xi32>
    %c8_i32_151 = arith.constant 8 : i32
    %1025 = vector.broadcast %c8_i32_151 : i32 to vector<8x1xi32>
    %1026 = arith.cmpi slt, %1024, %1025 : vector<8x1xi32>
    %1027 = arith.andi %1022, %1026 : vector<8x1xi1>
    %1028 = vector.shape_cast %1027 : vector<8x1xi1> to vector<8x1xi1>
    %1029 = vector.broadcast %1028 : vector<8x1xi1> to vector<8x2xi1>
    %1030 = arith.select %1029, %1020, %958 : vector<8x2xi1>, vector<8x2xf32>
    %1031 = vector.shape_cast %1027 : vector<8x1xi1> to vector<8x1xi1>
    %1032 = vector.broadcast %1031 : vector<8x1xi1> to vector<8x2xi1>
    %1033 = arith.select %1032, %1018, %961 : vector<8x2xi1>, vector<8x2xf32>
    %c13_i32 = arith.constant 13 : i32
    %1034 = vector.extract_strided_slice %1030 {offsets = [5, 0], sizes = [1, 2], strides = [1, 1]} : vector<8x2xf32> to vector<1x2xf32>
    %c0_152 = arith.constant 0 : index
    %c0_153 = arith.constant 0 : index
    %1035 = vector.load %arg3[%c0_152, %c0_153] : memref<1x2xf32, #tpu.memory_space<vmem>>, vector<1x2xf32>
    tpu.vector_store %arg3[%c0_152, %c0_153], %1034 {strides = array<i32>} : memref<1x2xf32, #tpu.memory_space<vmem>>, vector<1x2xf32>,
    return
  }
  func.func @transform_0(%arg0: i32) -> (i32, i32) {
    %c0_i32 = arith.constant 0 : i32
    %c0_i32_0 = arith.constant 0 : i32
    return %arg0, %c0_i32 : i32, i32
  }
  func.func @transform_1(%arg0: i32) -> (i32, i32) {
    %c0_i32 = arith.constant 0 : i32
    %c0_i32_0 = arith.constant 0 : i32
    %c0_i32_1 = arith.constant 0 : i32
    return %c0_i32, %c0_i32_0 : i32, i32
  }
  func.func @transform_2(%arg0: i32) -> (i32, i32) {
    %c0_i32 = arith.constant 0 : i32
    %c0_i32_0 = arith.constant 0 : i32
    return %c0_i32, %arg0 : i32, i32
  }
}

</mosaic_0001>

<llo_original>
// kernel: model04_forward.1
$region0: #{model04_forward.1}
  #allocation0 [shape = 'u32[]', space=smem, size = 0x4, offset = 0x4, fixed_abs, tag = 'smem constant byte address 0x4 - core index']
  #allocation1 [shape = 'u32[144,128]{1,0:T(1,128)}', space=vmem, size = 0x12000, scoped, tag = 'internal scratch']
  #allocation2 [shape = 'f32[8,4,2]{2,1,0:T(4,128)}', space=vmem, size = 0x4000, scoped, tag = 'scratch operand']
  %s0 = inlined_call_operand.vmem [shape: f32[2,64], index: 0, kind: input, shape index: {}]
  %s1 = inlined_call_operand.vmem [shape: f32[12,12], index: 1, kind: input, shape index: {}]
  %s2 = inlined_call_operand.hbm [shape: f32[1,2], index: 2, kind: output, shape index: {}]
  %s3 = sld [smem:[#allocation0]]
  $region18: #{model04_forward.1} parent=0
    _
  %s5 = ssub.s32 1, %s3
  %s6 = scalar_select 0, %s5, %s3
  $region1: #{model04_forward.1} parent=0
    #allocation3 [shape = 'u8[512]{0}', space=vmem, size = 0x400, scoped, tag = 'output window, operand 0, single buffered']
    #allocation4 [shape = 's32[1]{0}', space=sflag, size = 0x4, scoped, tag = 'scoped memory for model04_forward.1']
    %7 = vsyncpa [#allocation4], 0
    // Predicated region
    $region2: #{model04_forward.1} parent=1 // pred_check
      _
    $region3: #{model04_forward.1} parent=1 // pred_check_branch
      %9 = sbr.rel (0) target = $region5
    $region4: #{model04_forward.1} parent=1 // pred_region
      _
    $region5: #{model04_forward.1} parent=1 // pred_fallthru
      _
    // Predicated region
    $region6: #{model04_forward.1} parent=1 // pred_check
      _
    $region7: #{model04_forward.1} parent=1 // pred_check_branch
      %11 = sbr.rel (0) target = $region9
    $region8: #{model04_forward.1} parent=1 // pred_region
      _
    $region9: #{model04_forward.1} parent=1 // pred_fallthru
      _
    %v12 = vld [vmem:[%s1 + $0x8] sm:$0xf]
    %14 = vset.pattern.permute.xlu0 8
    %15 = vperm.xlu0 %14, %v12
    %v16 = vpop.permute.xlu0 %15
    %v18 = vld [vmem:[%s1] sm:$0xff]
    %20 = vset.pattern.permute.xlu0 0
    %21 = vperm.xlu0 %20, %v18
    %v22 = vpop.permute.xlu0 %21
    %24 = vset.pattern.permute.xlu0 1
    %25 = vperm.xlu0 %24, %v18
    %v26 = vpop.permute.xlu0 %25
    %28 = vset.pattern.permute.xlu0 2
    %29 = vperm.xlu0 %28, %v18
    %v30 = vpop.permute.xlu0 %29
    %32 = vset.pattern.permute.xlu0 3
    %33 = vperm.xlu0 %32, %v18
    %v34 = vpop.permute.xlu0 %33
    %36 = vset.pattern.permute.xlu0 4
    %37 = vperm.xlu0 %36, %v18
    %v38 = vpop.permute.xlu0 %37
    %40 = vset.pattern.permute.xlu0 5
    %41 = vperm.xlu0 %40, %v18
    %v42 = vpop.permute.xlu0 %41
    %44 = vset.pattern.permute.xlu0 6
    %45 = vperm.xlu0 %44, %v18
    %v46 = vpop.permute.xlu0 %45
    %48 = vset.pattern.permute.xlu0 7
    %49 = vperm.xlu0 %48, %v18
    %v50 = vpop.permute.xlu0 %49
    %52 = vset.pattern.permute.xlu0 8
    %53 = vperm.xlu0 %52, %v18
    %v54 = vpop.permute.xlu0 %53
    %56 = vset.pattern.permute.xlu0 9
    %57 = vperm.xlu0 %56, %v18
    %v58 = vpop.permute.xlu0 %57
    %60 = vset.pattern.permute.xlu0 10
    %61 = vperm.xlu0 %60, %v18
    %v62 = vpop.permute.xlu0 %61
    %64 = vset.pattern.permute.xlu0 11
    %65 = vperm.xlu0 %64, %v18
    %v66 = vpop.permute.xlu0 %65
    %v68 = vlaneseq
    %v69 = vshrl.u32 %v68, 7
    %vm70 = vcmp.eq.s32.totalorder %v69, 0
    %v71 = vsel %vm70, 1, 0
    %v72 = vcvt.s32.f32 %v71
    %v73 = vld [vmem:[%s0] sm:$0x3]
    %vm74 = vcmask 64512
    %v75 = vsel %vm74, %v12, 0
    %v78 = vsel %vm74, %v73, 0
    %80 = vmatprep.subr.mxu0 0.0
    %81 = vmatpush1.xpose.msra.mxu0 %v78
    %82 = vmatprep.subr.mxu0 0.0
    %83 = vmatpush1.xpose.msra.mxu0 0.0
    %84 = vmatprep.subr.mxu0 0.0
    %85 = vmatpush1.xpose.msra.mxu0 0.0
    %86 = vmatprep.subr.mxu0 0.0
    %87 = vmatpush1.xpose.msra.mxu0 0.0
    %88 = vmatprep.subr.mxu0 0.0
    %89 = vmatpush1.xpose.msra.mxu0 0.0
    %90 = vmatprep.subr.mxu0 0.0
    %91 = vmatpush1.xpose.msra.mxu0 0.0
    %92 = vmatprep.subr.mxu0 0.0
    %93 = vmatpush1.xpose.msra.mxu0 0.0
    %94 = vmatprep.subr.mxu0 0.0
    %95 = vmatpush1.xpose.msra.mxu0 0.0
    %96 = vmatprep.subr.mxu0 0.0
    %97 = vmatpush1.xpose.msra.mxu0 0.0
    %98 = vmatprep.subr.mxu0 0.0
    %99 = vmatpush1.xpose.msra.mxu0 0.0
    %100 = vmatprep.subr.mxu0 0.0
    %101 = vmatpush1.xpose.msra.mxu0 0.0
    %102 = vmatprep.subr.mxu0 0.0
    %103 = vmatpush1.xpose.msra.mxu0 0.0
    %104 = vmatprep.subr.mxu0 0.0
    %105 = vmatpush1.xpose.msra.mxu0 0.0
    %106 = vmatprep.subr.mxu0 0.0
    %107 = vmatpush1.xpose.msra.mxu0 0.0
    %108 = vmatprep.subr.mxu0 0.0
    %109 = vmatpush1.xpose.msra.mxu0 0.0
    %110 = vmatprep.subr.mxu0 0.0
    %111 = vmatpush1.xpose.msra.mxu0 0.0
    %112 = vmatprep.subr.mxu0 0.0
    %113 = vmatpush1.xpose.msra.mxu0 0.0
    %114 = vmatprep.subr.mxu0 0.0
    %115 = vmatpush1.xpose.msra.mxu0 0.0
    %116 = vmatprep.subr.mxu0 0.0
    %117 = vmatpush1.xpose.msra.mxu0 0.0
    %118 = vmatprep.subr.mxu0 0.0
    %119 = vmatpush1.xpose.msra.mxu0 0.0
    %120 = vmatprep.subr.mxu0 0.0
    %121 = vmatpush1.xpose.msra.mxu0 0.0
    %122 = vmatprep.subr.mxu0 0.0
    %123 = vmatpush1.xpose.msra.mxu0 0.0
    %124 = vmatprep.subr.mxu0 0.0
    %125 = vmatpush1.xpose.msra.mxu0 0.0
    %126 = vmatprep.subr.mxu0 0.0
    %127 = vmatpush1.xpose.msra.mxu0 0.0
    %128 = vmatprep.subr.mxu0 0.0
    %129 = vmatpush1.xpose.msra.mxu0 0.0
    %130 = vmatprep.subr.mxu0 0.0
    %131 = vmatpush1.xpose.msra.mxu0 0.0
    %132 = vmatprep.subr.mxu0 0.0
    %133 = vmatpush1.xpose.msra.mxu0 0.0
    %134 = vmatprep.subr.mxu0 0.0
    %135 = vmatpush1.xpose.msra.mxu0 0.0
    %136 = vmatprep.subr.mxu0 0.0
    %137 = vmatpush1.xpose.msra.mxu0 0.0
    %138 = vmatprep.subr.mxu0 0.0
    %139 = vmatpush1.xpose.msra.mxu0 0.0
    %140 = vmatprep.subr.mxu0 0.0
    %141 = vmatpush1.xpose.msra.mxu0 0.0
    %142 = vmatprep.subr.mxu0 0.0
    %143 = vmatpush1.xpose.msra.mxu0 0.0
    %144 = vmatprep.mubr.f32.mxu0 0.0
    %145 = vmatmul.mubr.f32.gmra.mrb[0].mxu0 %v75
    %v146 = vpop.f32.mrb[0].mxu0
    %v147 = vadd.f32 %v16, %v146
    %v148 = vpop.f32.mrb[0].mxu0
    %149 = vdwg.mxu0
    %vm150 = vcmask 11264
    %151 = vst.msk [vmem:[#allocation2] sm:$0xf] %vm150, %v147
    %v152 = vld [vmem:[%s0] sm:$0x3]
    %154 = vrot.lane.b32.xlu0 %v152, 120
    %v155 = vpop.permute.xlu0 %154
    %v156 = vsel %vm74, %v155, 0
    %158 = vmatprep.subr.mxu0 0.0
    %159 = vmatpush1.xpose.msra.mxu0 %v156
    %160 = vmatprep.subr.mxu0 0.0
    %161 = vmatpush1.xpose.msra.mxu0 0.0
    %162 = vmatprep.subr.mxu0 0.0
    %163 = vmatpush1.xpose.msra.mxu0 0.0
    %164 = vmatprep.subr.mxu0 0.0
    %165 = vmatpush1.xpose.msra.mxu0 0.0
    %166 = vmatprep.subr.mxu0 0.0
    %167 = vmatpush1.xpose.msra.mxu0 0.0
    %168 = vmatprep.subr.mxu0 0.0
    %169 = vmatpush1.xpose.msra.mxu0 0.0
    %170 = vmatprep.subr.mxu0 0.0
    %171 = vmatpush1.xpose.msra.mxu0 0.0
    %172 = vmatprep.subr.mxu0 0.0
    %173 = vmatpush1.xpose.msra.mxu0 0.0
    %174 = vmatprep.subr.mxu0 0.0
    %175 = vmatpush1.xpose.msra.mxu0 0.0
    %176 = vmatprep.subr.mxu0 0.0
    %177 = vmatpush1.xpose.msra.mxu0 0.0
    %178 = vmatprep.subr.mxu0 0.0
    %179 = vmatpush1.xpose.msra.mxu0 0.0
    %180 = vmatprep.subr.mxu0 0.0
    %181 = vmatpush1.xpose.msra.mxu0 0.0
    %182 = vmatprep.subr.mxu0 0.0
    %183 = vmatpush1.xpose.msra.mxu0 0.0
    %184 = vmatprep.subr.mxu0 0.0
    %185 = vmatpush1.xpose.msra.mxu0 0.0
    %186 = vmatprep.subr.mxu0 0.0
    %187 = vmatpush1.xpose.msra.mxu0 0.0
    %188 = vmatprep.subr.mxu0 0.0
    %189 = vmatpush1.xpose.msra.mxu0 0.0
    %190 = vmatprep.subr.mxu0 0.0
    %191 = vmatpush1.xpose.msra.mxu0 0.0
    %192 = vmatprep.subr.mxu0 0.0
    %193 = vmatpush1.xpose.msra.mxu0 0.0
    %194 = vmatprep.subr.mxu0 0.0
    %195 = vmatpush1.xpose.msra.mxu0 0.0
    %196 = vmatprep.subr.mxu0 0.0
    %197 = vmatpush1.xpose.msra.mxu0 0.0
    %198 = vmatprep.subr.mxu0 0.0
    %199 = vmatpush1.xpose.msra.mxu0 0.0
    %200 = vmatprep.subr.mxu0 0.0
    %201 = vmatpush1.xpose.msra.mxu0 0.0
    %202 = vmatprep.subr.mxu0 0.0
    %203 = vmatpush1.xpose.msra.mxu0 0.0
    %204 = vmatprep.subr.mxu0 0.0
    %205 = vmatpush1.xpose.msra.mxu0 0.0
    %206 = vmatprep.subr.mxu0 0.0
    %207 = vmatpush1.xpose.msra.mxu0 0.0
    %208 = vmatprep.subr.mxu0 0.0
    %209 = vmatpush1.xpose.msra.mxu0 0.0
    %210 = vmatprep.subr.mxu0 0.0
    %211 = vmatpush1.xpose.msra.mxu0 0.0
    %212 = vmatprep.subr.mxu0 0.0
    %213 = vmatpush1.xpose.msra.mxu0 0.0
    %214 = vmatprep.subr.mxu0 0.0
    %215 = vmatpush1.xpose.msra.mxu0 0.0
    %216 = vmatprep.subr.mxu0 0.0
    %217 = vmatpush1.xpose.msra.mxu0 0.0
    %218 = vmatprep.subr.mxu0 0.0
    %219 = vmatpush1.xpose.msra.mxu0 0.0
    %220 = vmatprep.subr.mxu0 0.0
    %221 = vmatpush1.xpose.msra.mxu0 0.0
    %222 = vmatprep.mubr.f32.mxu0 0.0
    %223 = vmatmul.mubr.f32.gmra.mrb[0].mxu0 %v75
    %v224 = vpop.f32.mrb[0].mxu0
    %v225 = vadd.f32 %v16, %v224
    %v226 = vpop.f32.mrb[0].mxu0
    %227 = vdwg.mxu0
    %s228 = scalar_lea.vmem [#allocation2], 4
    %229 = vst.msk [vmem:[%s228] sm:$0xf] %vm150, %v225
    %v230 = vld [vmem:[%s0] sm:$0x3]
    %232 = vrot.lane.b32.xlu0 %v230, 112
    %v233 = vpop.permute.xlu0 %232
    %v234 = vsel %vm74, %v233, 0
    %236 = vmatprep.subr.mxu0 0.0
    %237 = vmatpush1.xpose.msra.mxu0 %v234
    %238 = vmatprep.subr.mxu0 0.0
    %239 = vmatpush1.xpose.msra.mxu0 0.0
    %240 = vmatprep.subr.mxu0 0.0
    %241 = vmatpush1.xpose.msra.mxu0 0.0
    %242 = vmatprep.subr.mxu0 0.0
    %243 = vmatpush1.xpose.msra.mxu0 0.0
    %244 = vmatprep.subr.mxu0 0.0
    %245 = vmatpush1.xpose.msra.mxu0 0.0
    %246 = vmatprep.subr.mxu0 0.0
    %247 = vmatpush1.xpose.msra.mxu0 0.0
    %248 = vmatprep.subr.mxu0 0.0
    %249 = vmatpush1.xpose.msra.mxu0 0.0
    %250 = vmatprep.subr.mxu0 0.0
    %251 = vmatpush1.xpose.msra.mxu0 0.0
    %252 = vmatprep.subr.mxu0 0.0
    %253 = vmatpush1.xpose.msra.mxu0 0.0
    %254 = vmatprep.subr.mxu0 0.0
    %255 = vmatpush1.xpose.msra.mxu0 0.0
    %256 = vmatprep.subr.mxu0 0.0
    %257 = vmatpush1.xpose.msra.mxu0 0.0
    %258 = vmatprep.subr.mxu0 0.0
    %259 = vmatpush1.xpose.msra.mxu0 0.0
    %260 = vmatprep.subr.mxu0 0.0
    %261 = vmatpush1.xpose.msra.mxu0 0.0
    %262 = vmatprep.subr.mxu0 0.0
    %263 = vmatpush1.xpose.msra.mxu0 0.0
    %264 = vmatprep.subr.mxu0 0.0
    %265 = vmatpush1.xpose.msra.mxu0 0.0
    %266 = vmatprep.subr.mxu0 0.0
    %267 = vmatpush1.xpose.msra.mxu0 0.0
    %268 = vmatprep.subr.mxu0 0.0
    %269 = vmatpush1.xpose.msra.mxu0 0.0
    %270 = vmatprep.subr.mxu0 0.0
    %271 = vmatpush1.xpose.msra.mxu0 0.0
    %272 = vmatprep.subr.mxu0 0.0
    %273 = vmatpush1.xpose.msra.mxu0 0.0
    %274 = vmatprep.subr.mxu0 0.0
    %275 = vmatpush1.xpose.msra.mxu0 0.0
    %276 = vmatprep.subr.mxu0 0.0
    %277 = vmatpush1.xpose.msra.mxu0 0.0
    %278 = vmatprep.subr.mxu0 0.0
    %279 = vmatpush1.xpose.msra.mxu0 0.0
    %280 = vmatprep.subr.mxu0 0.0
    %281 = vmatpush1.xpose.msra.mxu0 0.0
    %282 = vmatprep.subr.mxu0 0.0
    %283 = vmatpush1.xpose.msra.mxu0 0.0
    %284 = vmatprep.subr.mxu0 0.0
    %285 = vmatpush1.xpose.msra.mxu0 0.0
    %286 = vmatprep.subr.mxu0 0.0
    %287 = vmatpush1.xpose.msra.mxu0 0.0
    %288 = vmatprep.subr.mxu0 0.0
    %289 = vmatpush1.xpose.msra.mxu0 0.0
    %290 = vmatprep.subr.mxu0 0.0
    %291 = vmatpush1.xpose.msra.mxu0 0.0
    %292 = vmatprep.subr.mxu0 0.0
    %293 = vmatpush1.xpose.msra.mxu0 0.0
    %294 = vmatprep.subr.mxu0 0.0
    %295 = vmatpush1.xpose.msra.mxu0 0.0
    %296 = vmatprep.subr.mxu0 0.0
    %297 = vmatpush1.xpose.msra.mxu0 0.0
    %298 = vmatprep.subr.mxu0 0.0
    %299 = vmatpush1.xpose.msra.mxu0 0.0
    %300 = vmatprep.mubr.f32.mxu0 0.0
    %301 = vmatmul.mubr.f32.gmra.mrb[0].mxu0 %v75
    %v302 = vpop.f32.mrb[0].mxu0
    %v303 = vadd.f32 %v16, %v302
    %v304 = vpop.f32.mrb[0].mxu0
    %305 = vdwg.mxu0
    %s306 = scalar_lea.vmem [#allocation2], 8
    %307 = vst.msk [vmem:[%s306] sm:$0xf] %vm150, %v303
    %v308 = vld [vmem:[%s0] sm:$0x3]
    %310 = vrot.lane.b32.xlu0 %v308, 104
    %v311 = vpop.permute.xlu0 %310
    %v312 = vsel %vm74, %v311, 0
    %314 = vmatprep.subr.mxu0 0.0
    %315 = vmatpush1.xpose.msra.mxu0 %v312
    %316 = vmatprep.subr.mxu0 0.0
    %317 = vmatpush1.xpose.msra.mxu0 0.0
    %318 = vmatprep.subr.mxu0 0.0
    %319 = vmatpush1.xpose.msra.mxu0 0.0
    %320 = vmatprep.subr.mxu0 0.0
    %321 = vmatpush1.xpose.msra.mxu0 0.0
    %322 = vmatprep.subr.mxu0 0.0
    %323 = vmatpush1.xpose.msra.mxu0 0.0
    %324 = vmatprep.subr.mxu0 0.0
    %325 = vmatpush1.xpose.msra.mxu0 0.0
    %326 = vmatprep.subr.mxu0 0.0
    %327 = vmatpush1.xpose.msra.mxu0 0.0
    %328 = vmatprep.subr.mxu0 0.0
    %329 = vmatpush1.xpose.msra.mxu0 0.0
    %330 = vmatprep.subr.mxu0 0.0
    %331 = vmatpush1.xpose.msra.mxu0 0.0
    %332 = vmatprep.subr.mxu0 0.0
    %333 = vmatpush1.xpose.msra.mxu0 0.0
    %334 = vmatprep.subr.mxu0 0.0
    %335 = vmatpush1.xpose.msra.mxu0 0.0
    %336 = vmatprep.subr.mxu0 0.0
    %337 = vmatpush1.xpose.msra.mxu0 0.0
    %338 = vmatprep.subr.mxu0 0.0
    %339 = vmatpush1.xpose.msra.mxu0 0.0
    %340 = vmatprep.subr.mxu0 0.0
    %341 = vmatpush1.xpose.msra.mxu0 0.0
    %342 = vmatprep.subr.mxu0 0.0
    %343 = vmatpush1.xpose.msra.mxu0 0.0
    %344 = vmatprep.subr.mxu0 0.0
    %345 = vmatpush1.xpose.msra.mxu0 0.0
    %346 = vmatprep.subr.mxu0 0.0
    %347 = vmatpush1.xpose.msra.mxu0 0.0
    %348 = vmatprep.subr.mxu0 0.0
    %349 = vmatpush1.xpose.msra.mxu0 0.0
    %350 = vmatprep.subr.mxu0 0.0
    %351 = vmatpush1.xpose.msra.mxu0 0.0
    %352 = vmatprep.subr.mxu0 0.0
    %353 = vmatpush1.xpose.msra.mxu0 0.0
    %354 = vmatprep.subr.mxu0 0.0
    %355 = vmatpush1.xpose.msra.mxu0 0.0
    %356 = vmatprep.subr.mxu0 0.0
    %357 = vmatpush1.xpose.msra.mxu0 0.0
    %358 = vmatprep.subr.mxu0 0.0
    %359 = vmatpush1.xpose.msra.mxu0 0.0
    %360 = vmatprep.subr.mxu0 0.0
    %361 = vmatpush1.xpose.msra.mxu0 0.0
    %362 = vmatprep.subr.mxu0 0.0
    %363 = vmatpush1.xpose.msra.mxu0 0.0
    %364 = vmatprep.subr.mxu0 0.0
    %365 = vmatpush1.xpose.msra.mxu0 0.0
    %366 = vmatprep.subr.mxu0 0.0
    %367 = vmatpush1.xpose.msra.mxu0 0.0
    %368 = vmatprep.subr.mxu0 0.0
    %369 = vmatpush1.xpose.msra.mxu0 0.0
    %370 = vmatprep.subr.mxu0 0.0
    %371 = vmatpush1.xpose.msra.mxu0 0.0
    %372 = vmatprep.subr.mxu0 0.0
    %373 = vmatpush1.xpose.msra.mxu0 0.0
    %374 = vmatprep.subr.mxu0 0.0
    %375 = vmatpush1.xpose.msra.mxu0 0.0
    %376 = vmatprep.subr.mxu0 0.0
    %377 = vmatpush1.xpose.msra.mxu0 0.0
    %378 = vmatprep.mubr.f32.mxu0 0.0
    %379 = vmatmul.mubr.f32.gmra.mrb[0].mxu0 %v75
    %v380 = vpop.f32.mrb[0].mxu0
    %v381 = vadd.f32 %v16, %v380
    %v382 = vpop.f32.mrb[0].mxu0
    %383 = vdwg.mxu0
    %s384 = scalar_lea.vmem [#allocation2], 12
    %385 = vst.msk [vmem:[%s384] sm:$0xf] %vm150, %v381
    %v386 = vld [vmem:[%s0] sm:$0x3]
    %388 = vrot.lane.b32.xlu0 %v386, 96
    %v389 = vpop.permute.xlu0 %388
    %v390 = vsel %vm74, %v389, 0
    %392 = vmatprep.subr.mxu0 0.0
    %393 = vmatpush1.xpose.msra.mxu0 %v390
    %394 = vmatprep.subr.mxu0 0.0
    %395 = vmatpush1.xpose.msra.mxu0 0.0
    %396 = vmatprep.subr.mxu0 0.0
    %397 = vmatpush1.xpose.msra.mxu0 0.0
    %398 = vmatprep.subr.mxu0 0.0
    %399 = vmatpush1.xpose.msra.mxu0 0.0
    %400 = vmatprep.subr.mxu0 0.0
    %401 = vmatpush1.xpose.msra.mxu0 0.0
    %402 = vmatprep.subr.mxu0 0.0
    %403 = vmatpush1.xpose.msra.mxu0 0.0
    %404 = vmatprep.subr.mxu0 0.0
    %405 = vmatpush1.xpose.msra.mxu0 0.0
    %406 = vmatprep.subr.mxu0 0.0
    %407 = vmatpush1.xpose.msra.mxu0 0.0
    %408 = vmatprep.subr.mxu0 0.0
    %409 = vmatpush1.xpose.msra.mxu0 0.0
    %410 = vmatprep.subr.mxu0 0.0
    %411 = vmatpush1.xpose.msra.mxu0 0.0
    %412 = vmatprep.subr.mxu0 0.0
    %413 = vmatpush1.xpose.msra.mxu0 0.0
    %414 = vmatprep.subr.mxu0 0.0
    %415 = vmatpush1.xpose.msra.mxu0 0.0
    %416 = vmatprep.subr.mxu0 0.0
    %417 = vmatpush1.xpose.msra.mxu0 0.0
    %418 = vmatprep.subr.mxu0 0.0
    %419 = vmatpush1.xpose.msra.mxu0 0.0
    %420 = vmatprep.subr.mxu0 0.0
    %421 = vmatpush1.xpose.msra.mxu0 0.0
    %422 = vmatprep.subr.mxu0 0.0
    %423 = vmatpush1.xpose.msra.mxu0 0.0
    %424 = vmatprep.subr.mxu0 0.0
    %425 = vmatpush1.xpose.msra.mxu0 0.0
    %426 = vmatprep.subr.mxu0 0.0
    %427 = vmatpush1.xpose.msra.mxu0 0.0
    %428 = vmatprep.subr.mxu0 0.0
    %429 = vmatpush1.xpose.msra.mxu0 0.0
    %430 = vmatprep.subr.mxu0 0.0
    %431 = vmatpush1.xpose.msra.mxu0 0.0
    %432 = vmatprep.subr.mxu0 0.0
    %433 = vmatpush1.xpose.msra.mxu0 0.0
    %434 = vmatprep.subr.mxu0 0.0
    %435 = vmatpush1.xpose.msra.mxu0 0.0
    %436 = vmatprep.subr.mxu0 0.0
    %437 = vmatpush1.xpose.msra.mxu0 0.0
    %438 = vmatprep.subr.mxu0 0.0
    %439 = vmatpush1.xpose.msra.mxu0 0.0
    %440 = vmatprep.subr.mxu0 0.0
    %441 = vmatpush1.xpose.msra.mxu0 0.0
    %442 = vmatprep.subr.mxu0 0.0
    %443 = vmatpush1.xpose.msra.mxu0 0.0
    %444 = vmatprep.subr.mxu0 0.0
    %445 = vmatpush1.xpose.msra.mxu0 0.0
    %446 = vmatprep.subr.mxu0 0.0
    %447 = vmatpush1.xpose.msra.mxu0 0.0
    %448 = vmatprep.subr.mxu0 0.0
    %449 = vmatpush1.xpose.msra.mxu0 0.0
    %450 = vmatprep.subr.mxu0 0.0
    %451 = vmatpush1.xpose.msra.mxu0 0.0
    %452 = vmatprep.subr.mxu0 0.0
    %453 = vmatpush1.xpose.msra.mxu0 0.0
    %454 = vmatprep.subr.mxu0 0.0
    %455 = vmatpush1.xpose.msra.mxu0 0.0
    %456 = vmatprep.mubr.f32.mxu0 0.0
    %457 = vmatmul.mubr.f32.gmra.mrb[0].mxu0 %v75
    %v458 = vpop.f32.mrb[0].mxu0
    %v459 = vadd.f32 %v16, %v458
    %v460 = vpop.f32.mrb[0].mxu0
    %461 = vdwg.mxu0
    %s462 = scalar_lea.vmem [#allocation2], 16
    %463 = vst.msk [vmem:[%s462] sm:$0xf] %vm150, %v459
    %v464 = vld [vmem:[%s0] sm:$0x3]
    %466 = vrot.lane.b32.xlu0 %v464, 88
    %v467 = vpop.permute.xlu0 %466
    %v468 = vsel %vm74, %v467, 0
    %470 = vmatprep.subr.mxu0 0.0
    %471 = vmatpush1.xpose.msra.mxu0 %v468
    %472 = vmatprep.subr.mxu0 0.0
    %473 = vmatpush1.xpose.msra.mxu0 0.0
    %474 = vmatprep.subr.mxu0 0.0
    %475 = vmatpush1.xpose.msra.mxu0 0.0
    %476 = vmatprep.subr.mxu0 0.0
    %477 = vmatpush1.xpose.msra.mxu0 0.0
    %478 = vmatprep.subr.mxu0 0.0
    %479 = vmatpush1.xpose.msra.mxu0 0.0
    %480 = vmatprep.subr.mxu0 0.0
    %481 = vmatpush1.xpose.msra.mxu0 0.0
    %482 = vmatprep.subr.mxu0 0.0
    %483 = vmatpush1.xpose.msra.mxu0 0.0
    %484 = vmatprep.subr.mxu0 0.0
    %485 = vmatpush1.xpose.msra.mxu0 0.0
    %486 = vmatprep.subr.mxu0 0.0
    %487 = vmatpush1.xpose.msra.mxu0 0.0
    %488 = vmatprep.subr.mxu0 0.0
    %489 = vmatpush1.xpose.msra.mxu0 0.0
    %490 = vmatprep.subr.mxu0 0.0
    %491 = vmatpush1.xpose.msra.mxu0 0.0
    %492 = vmatprep.subr.mxu0 0.0
    %493 = vmatpush1.xpose.msra.mxu0 0.0
    %494 = vmatprep.subr.mxu0 0.0
    %495 = vmatpush1.xpose.msra.mxu0 0.0
    %496 = vmatprep.subr.mxu0 0.0
    %497 = vmatpush1.xpose.msra.mxu0 0.0
    %498 = vmatprep.subr.mxu0 0.0
    %499 = vmatpush1.xpose.msra.mxu0 0.0
    %500 = vmatprep.subr.mxu0 0.0
    %501 = vmatpush1.xpose.msra.mxu0 0.0
    %502 = vmatprep.subr.mxu0 0.0
    %503 = vmatpush1.xpose.msra.mxu0 0.0
    %504 = vmatprep.subr.mxu0 0.0
    %505 = vmatpush1.xpose.msra.mxu0 0.0
    %506 = vmatprep.subr.mxu0 0.0
    %507 = vmatpush1.xpose.msra.mxu0 0.0
    %508 = vmatprep.subr.mxu0 0.0
    %509 = vmatpush1.xpose.msra.mxu0 0.0
    %510 = vmatprep.subr.mxu0 0.0
    %511 = vmatpush1.xpose.msra.mxu0 0.0
    %512 = vmatprep.subr.mxu0 0.0
    %513 = vmatpush1.xpose.msra.mxu0 0.0
    %514 = vmatprep.subr.mxu0 0.0
    %515 = vmatpush1.xpose.msra.mxu0 0.0
    %516 = vmatprep.subr.mxu0 0.0
    %517 = vmatpush1.xpose.msra.mxu0 0.0
    %518 = vmatprep.subr.mxu0 0.0
    %519 = vmatpush1.xpose.msra.mxu0 0.0
    %520 = vmatprep.subr.mxu0 0.0
    %521 = vmatpush1.xpose.msra.mxu0 0.0
    %522 = vmatprep.subr.mxu0 0.0
    %523 = vmatpush1.xpose.msra.mxu0 0.0
    %524 = vmatprep.subr.mxu0 0.0
    %525 = vmatpush1.xpose.msra.mxu0 0.0
    %526 = vmatprep.subr.mxu0 0.0
    %527 = vmatpush1.xpose.msra.mxu0 0.0
    %528 = vmatprep.subr.mxu0 0.0
    %529 = vmatpush1.xpose.msra.mxu0 0.0
    %530 = vmatprep.subr.mxu0 0.0
    %531 = vmatpush1.xpose.msra.mxu0 0.0
    %532 = vmatprep.subr.mxu0 0.0
    %533 = vmatpush1.xpose.msra.mxu0 0.0
    %534 = vmatprep.mubr.f32.mxu0 0.0
    %535 = vmatmul.mubr.f32.gmra.mrb[0].mxu0 %v75
    %v536 = vpop.f32.mrb[0].mxu0
    %v537 = vadd.f32 %v16, %v536
    %v538 = vpop.f32.mrb[0].mxu0
    %539 = vdwg.mxu0
    %s540 = scalar_lea.vmem [#allocation2], 20
    %541 = vst.msk [vmem:[%s540] sm:$0xf] %vm150, %v537
    %v542 = vld [vmem:[%s0] sm:$0x3]
    %544 = vrot.lane.b32.xlu0 %v542, 80
    %v545 = vpop.permute.xlu0 %544
    %v546 = vsel %vm74, %v545, 0
    %548 = vmatprep.subr.mxu0 0.0
    %549 = vmatpush1.xpose.msra.mxu0 %v546
    %550 = vmatprep.subr.mxu0 0.0
    %551 = vmatpush1.xpose.msra.mxu0 0.0
    %552 = vmatprep.subr.mxu0 0.0
    %553 = vmatpush1.xpose.msra.mxu0 0.0
    %554 = vmatprep.subr.mxu0 0.0
    %555 = vmatpush1.xpose.msra.mxu0 0.0
    %556 = vmatprep.subr.mxu0 0.0
    %557 = vmatpush1.xpose.msra.mxu0 0.0
    %558 = vmatprep.subr.mxu0 0.0
    %559 = vmatpush1.xpose.msra.mxu0 0.0
    %560 = vmatprep.subr.mxu0 0.0
    %561 = vmatpush1.xpose.msra.mxu0 0.0
    %562 = vmatprep.subr.mxu0 0.0
    %563 = vmatpush1.xpose.msra.mxu0 0.0
    %564 = vmatprep.subr.mxu0 0.0
    %565 = vmatpush1.xpose.msra.mxu0 0.0
    %566 = vmatprep.subr.mxu0 0.0
    %567 = vmatpush1.xpose.msra.mxu0 0.0
    %568 = vmatprep.subr.mxu0 0.0
    %569 = vmatpush1.xpose.msra.mxu0 0.0
    %570 = vmatprep.subr.mxu0 0.0
    %571 = vmatpush1.xpose.msra.mxu0 0.0
    %572 = vmatprep.subr.mxu0 0.0
    %573 = vmatpush1.xpose.msra.mxu0 0.0
    %574 = vmatprep.subr.mxu0 0.0
    %575 = vmatpush1.xpose.msra.mxu0 0.0
    %576 = vmatprep.subr.mxu0 0.0
    %577 = vmatpush1.xpose.msra.mxu0 0.0
    %578 = vmatprep.subr.mxu0 0.0
    %579 = vmatpush1.xpose.msra.mxu0 0.0
    %580 = vmatprep.subr.mxu0 0.0
    %581 = vmatpush1.xpose.msra.mxu0 0.0
    %582 = vmatprep.subr.mxu0 0.0
    %583 = vmatpush1.xpose.msra.mxu0 0.0
    %584 = vmatprep.subr.mxu0 0.0
    %585 = vmatpush1.xpose.msra.mxu0 0.0
    %586 = vmatprep.subr.mxu0 0.0
    %587 = vmatpush1.xpose.msra.mxu0 0.0
    %588 = vmatprep.subr.mxu0 0.0
    %589 = vmatpush1.xpose.msra.mxu0 0.0
    %590 = vmatprep.subr.mxu0 0.0
    %591 = vmatpush1.xpose.msra.mxu0 0.0
    %592 = vmatprep.subr.mxu0 0.0
    %593 = vmatpush1.xpose.msra.mxu0 0.0
    %594 = vmatprep.subr.mxu0 0.0
    %595 = vmatpush1.xpose.msra.mxu0 0.0
    %596 = vmatprep.subr.mxu0 0.0
    %597 = vmatpush1.xpose.msra.mxu0 0.0
    %598 = vmatprep.subr.mxu0 0.0
    %599 = vmatpush1.xpose.msra.mxu0 0.0
    %600 = vmatprep.subr.mxu0 0.0
    %601 = vmatpush1.xpose.msra.mxu0 0.0
    %602 = vmatprep.subr.mxu0 0.0
    %603 = vmatpush1.xpose.msra.mxu0 0.0
    %604 = vmatprep.subr.mxu0 0.0
    %605 = vmatpush1.xpose.msra.mxu0 0.0
    %606 = vmatprep.subr.mxu0 0.0
    %607 = vmatpush1.xpose.msra.mxu0 0.0
    %608 = vmatprep.subr.mxu0 0.0
    %609 = vmatpush1.xpose.msra.mxu0 0.0
    %610 = vmatprep.subr.mxu0 0.0
    %611 = vmatpush1.xpose.msra.mxu0 0.0
    %612 = vmatprep.mubr.f32.mxu0 0.0
    %613 = vmatmul.mubr.f32.gmra.mrb[0].mxu0 %v75
    %v614 = vpop.f32.mrb[0].mxu0
    %v615 = vadd.f32 %v16, %v614
    %v616 = vpop.f32.mrb[0].mxu0
    %617 = vdwg.mxu0
    %s618 = scalar_lea.vmem [#allocation2], 24
    %619 = vst.msk [vmem:[%s618] sm:$0xf] %vm150, %v615
    %v620 = vld [vmem:[%s0] sm:$0x3]
    %622 = vrot.lane.b32.xlu0 %v620, 72
    %v623 = vpop.permute.xlu0 %622
    %v624 = vsel %vm74, %v623, 0
    %626 = vmatprep.subr.mxu0 0.0
    %627 = vmatpush1.xpose.msra.mxu0 %v624
    %628 = vmatprep.subr.mxu0 0.0
    %629 = vmatpush1.xpose.msra.mxu0 0.0
    %630 = vmatprep.subr.mxu0 0.0
    %631 = vmatpush1.xpose.msra.mxu0 0.0
    %632 = vmatprep.subr.mxu0 0.0
    %633 = vmatpush1.xpose.msra.mxu0 0.0
    %634 = vmatprep.subr.mxu0 0.0
    %635 = vmatpush1.xpose.msra.mxu0 0.0
    %636 = vmatprep.subr.mxu0 0.0
    %637 = vmatpush1.xpose.msra.mxu0 0.0
    %638 = vmatprep.subr.mxu0 0.0
    %639 = vmatpush1.xpose.msra.mxu0 0.0
    %640 = vmatprep.subr.mxu0 0.0
    %641 = vmatpush1.xpose.msra.mxu0 0.0
    %642 = vmatprep.subr.mxu0 0.0
    %643 = vmatpush1.xpose.msra.mxu0 0.0
    %644 = vmatprep.subr.mxu0 0.0
    %645 = vmatpush1.xpose.msra.mxu0 0.0
    %646 = vmatprep.subr.mxu0 0.0
    %647 = vmatpush1.xpose.msra.mxu0 0.0
    %648 = vmatprep.subr.mxu0 0.0
    %649 = vmatpush1.xpose.msra.mxu0 0.0
    %650 = vmatprep.subr.mxu0 0.0
    %651 = vmatpush1.xpose.msra.mxu0 0.0
    %652 = vmatprep.subr.mxu0 0.0
    %653 = vmatpush1.xpose.msra.mxu0 0.0
    %654 = vmatprep.subr.mxu0 0.0
    %655 = vmatpush1.xpose.msra.mxu0 0.0
    %656 = vmatprep.subr.mxu0 0.0
    %657 = vmatpush1.xpose.msra.mxu0 0.0
    %658 = vmatprep.subr.mxu0 0.0
    %659 = vmatpush1.xpose.msra.mxu0 0.0
    %660 = vmatprep.subr.mxu0 0.0
    %661 = vmatpush1.xpose.msra.mxu0 0.0
    %662 = vmatprep.subr.mxu0 0.0
    %663 = vmatpush1.xpose.msra.mxu0 0.0
    %664 = vmatprep.subr.mxu0 0.0
    %665 = vmatpush1.xpose.msra.mxu0 0.0
    %666 = vmatprep.subr.mxu0 0.0
    %667 = vmatpush1.xpose.msra.mxu0 0.0
    %668 = vmatprep.subr.mxu0 0.0
    %669 = vmatpush1.xpose.msra.mxu0 0.0
    %670 = vmatprep.subr.mxu0 0.0
    %671 = vmatpush1.xpose.msra.mxu0 0.0
    %672 = vmatprep.subr.mxu0 0.0
    %673 = vmatpush1.xpose.msra.mxu0 0.0
    %674 = vmatprep.subr.mxu0 0.0
    %675 = vmatpush1.xpose.msra.mxu0 0.0
    %676 = vmatprep.subr.mxu0 0.0
    %677 = vmatpush1.xpose.msra.mxu0 0.0
    %678 = vmatprep.subr.mxu0 0.0
    %679 = vmatpush1.xpose.msra.mxu0 0.0
    %680 = vmatprep.subr.mxu0 0.0
    %681 = vmatpush1.xpose.msra.mxu0 0.0
    %682 = vmatprep.subr.mxu0 0.0
    %683 = vmatpush1.xpose.msra.mxu0 0.0
    %684 = vmatprep.subr.mxu0 0.0
    %685 = vmatpush1.xpose.msra.mxu0 0.0
    %686 = vmatprep.subr.mxu0 0.0
    %687 = vmatpush1.xpose.msra.mxu0 0.0
    %688 = vmatprep.subr.mxu0 0.0
    %689 = vmatpush1.xpose.msra.mxu0 0.0
    %690 = vmatprep.mubr.f32.mxu0 0.0
    %691 = vmatmul.mubr.f32.gmra.mrb[0].mxu0 %v75
    %v692 = vpop.f32.mrb[0].mxu0
    %v693 = vadd.f32 %v16, %v692
    %v694 = vpop.f32.mrb[0].mxu0
    %695 = vdwg.mxu0
    %s696 = scalar_lea.vmem [#allocation2], 28
    %697 = vst.msk [vmem:[%s696] sm:$0xf] %vm150, %v693
    %v698 = vld [vmem:[#allocation2] sm:$0xf]
    %v699 = vmul.f32 %v22, 0.0
    %v700 = vmul.f32 %v38, 0.0
    %v701 = vadd.f32 %v699, %v700
    %v702 = vadd.f32 %v701, %v54
    %v703 = vlaneseq
    %v704 = vshrl.u32 %v703, 7
    %v705 = vsub.s32 0, %v704
    %v706 = vrot.slane %v698, %v705
    %v707 = vmul.f32 %v72, %v706
    %v708 = vadd.f32 %v702, %v707
    %v709 = vxor.u32 %v708, 2147483648
    %v710 = vmul.f32 %v709, 1.442695
    %v711 = vpow.pop %v710
    %v712 = vadd.f32 %v711, 1.0
    %v713 = vrcp.pop %v712
    %v714 = vmul.f32 1.0, %v713
    %v715 = vmul.f32 %v26, 0.0
    %v716 = vmul.f32 %v42, 0.0
    %v717 = vadd.f32 %v715, %v716
    %v718 = vadd.f32 %v717, %v58
    %v719 = vlaneseq
    %v720 = vshrl.u32 %v719, 7
    %v721 = vsub.s32 1, %v720
    %v722 = vrot.slane %v698, %v721
    %v723 = vmul.f32 %v72, %v722
    %v724 = vadd.f32 %v718, %v723
    %v725 = vxor.u32 %v724, 2147483648
    %v726 = vmul.f32 %v725, 1.442695
    %v727 = vpow.pop %v726
    %v728 = vadd.f32 %v727, 1.0
    %v729 = vrcp.pop %v728
    %v730 = vmul.f32 1.0, %v729
    %v731 = vmul.f32 %v30, 0.0
    %v732 = vmul.f32 %v46, 0.0
    %v733 = vadd.f32 %v731, %v732
    %v734 = vadd.f32 %v733, %v62
    %v735 = vlaneseq
    %v736 = vshrl.u32 %v735, 7
    %v737 = vsub.s32 2, %v736
    %v738 = vrot.slane %v698, %v737
    %v739 = vmul.f32 %v72, %v738
    %v740 = vadd.f32 %v734, %v739
    %v741 = vtanh.pop %v740
    %v742 = vmul.f32 %v34, 0.0
    %v743 = vmul.f32 %v50, 0.0
    %v744 = vadd.f32 %v742, %v743
    %v745 = vadd.f32 %v744, %v66
    %v746 = vlaneseq
    %v747 = vshrl.u32 %v746, 7
    %v748 = vsub.s32 3, %v747
    %v749 = vrot.slane %v698, %v748
    %v750 = vmul.f32 %v72, %v749
    %v751 = vadd.f32 %v745, %v750
    %v752 = vxor.u32 %v751, 2147483648
    %v753 = vmul.f32 %v752, 1.442695
    %v754 = vpow.pop %v753
    %v755 = vadd.f32 %v754, 1.0
    %v756 = vrcp.pop %v755
    %v757 = vmul.f32 1.0, %v756
    %v758 = vmul.f32 %v730, 0.0
    %v759 = vmul.f32 %v714, %v741
    %v760 = vadd.f32 %v758, %v759
    %v761 = vtanh.pop %v760
    %v762 = vmul.f32 %v757, %v761
    %vm763 = vcmp.le.s32.totalorder %v69, 0
    %v764 = vsub.s32 0, %v69
    %vm765 = vcmp.lt.s32.totalorder %v764, 8
    %vm766 = vmand %vm763, %vm765
    %v767 = vsel %vm766, 1, 0
    %vm768 = vcmp.eq.s32.totalorder %v767, 1
    %v769 = vsel %vm768, %v762, 0.0
    %v770 = vsel %vm768, %v760, 0.0
    %v771 = vld [vmem:[%s228] sm:$0xf]
    %v773 = vrot.slane %v769, 7
    %vm775 = vcmask 1040384
    %v776 = vsel %vm775, 0.0, %v773
    %v777 = vmul.f32 %v22, %v776
    %v778 = vmul.f32 %v38, %v769
    %v779 = vadd.f32 %v777, %v778
    %v780 = vadd.f32 %v779, %v54
    %v781 = vlaneseq
    %v782 = vshrl.u32 %v781, 7
    %v783 = vsub.s32 0, %v782
    %v784 = vrot.slane %v771, %v783
    %v785 = vmul.f32 %v72, %v784
    %v786 = vadd.f32 %v780, %v785
    %v787 = vxor.u32 %v786, 2147483648
    %v788 = vmul.f32 %v787, 1.442695
    %v789 = vpow.pop %v788
    %v790 = vadd.f32 %v789, 1.0
    %v791 = vrcp.pop %v790
    %v792 = vmul.f32 1.0, %v791
    %v793 = vmul.f32 %v26, %v776
    %v794 = vmul.f32 %v42, %v769
    %v795 = vadd.f32 %v793, %v794
    %v796 = vadd.f32 %v795, %v58
    %v797 = vlaneseq
    %v798 = vshrl.u32 %v797, 7
    %v799 = vsub.s32 1, %v798
    %v800 = vrot.slane %v771, %v799
    %v801 = vmul.f32 %v72, %v800
    %v802 = vadd.f32 %v796, %v801
    %v803 = vxor.u32 %v802, 2147483648
    %v804 = vmul.f32 %v803, 1.442695
    %v805 = vpow.pop %v804
    %v806 = vadd.f32 %v805, 1.0
    %v807 = vrcp.pop %v806
    %v808 = vmul.f32 1.0, %v807
    %v809 = vmul.f32 %v30, %v776
    %v810 = vmul.f32 %v46, %v769
    %v811 = vadd.f32 %v809, %v810
    %v812 = vadd.f32 %v811, %v62
    %v813 = vlaneseq
    %v814 = vshrl.u32 %v813, 7
    %v815 = vsub.s32 2, %v814
    %v816 = vrot.slane %v771, %v815
    %v817 = vmul.f32 %v72, %v816
    %v818 = vadd.f32 %v812, %v817
    %v819 = vtanh.pop %v818
    %v820 = vmul.f32 %v34, %v776
    %v821 = vmul.f32 %v50, %v769
    %v822 = vadd.f32 %v820, %v821
    %v823 = vadd.f32 %v822, %v66
    %v824 = vlaneseq
    %v825 = vshrl.u32 %v824, 7
    %v826 = vsub.s32 3, %v825
    %v827 = vrot.slane %v771, %v826
    %v828 = vmul.f32 %v72, %v827
    %v829 = vadd.f32 %v823, %v828
    %v830 = vxor.u32 %v829, 2147483648
    %v831 = vmul.f32 %v830, 1.442695
    %v832 = vpow.pop %v831
    %v833 = vadd.f32 %v832, 1.0
    %v834 = vrcp.pop %v833
    %v835 = vmul.f32 1.0, %v834
    %v836 = vmul.f32 %v808, %v770
    %v837 = vmul.f32 %v792, %v819
    %v838 = vadd.f32 %v836, %v837
    %v839 = vtanh.pop %v838
    %v840 = vmul.f32 %v835, %v839
    %vm841 = vcmp.le.s32.totalorder %v69, 1
    %v842 = vsub.s32 1, %v69
    %vm843 = vcmp.lt.s32.totalorder %v842, 8
    %vm844 = vmand %vm841, %vm843
    %v845 = vsel %vm844, 1, 0
    %vm846 = vcmp.eq.s32.totalorder %v845, 1
    %v847 = vsel %vm846, %v840, %v769
    %v848 = vsel %vm846, %v838, %v770
    %v849 = vld [vmem:[%s306] sm:$0xf]
    %v851 = vrot.slane %v847, 7
    %v853 = vsel %vm775, 0.0, %v851
    %v854 = vmul.f32 %v22, %v853
    %v855 = vmul.f32 %v38, %v847
    %v856 = vadd.f32 %v854, %v855
    %v857 = vadd.f32 %v856, %v54
    %v858 = vlaneseq
    %v859 = vshrl.u32 %v858, 7
    %v860 = vsub.s32 0, %v859
    %v861 = vrot.slane %v849, %v860
    %v862 = vmul.f32 %v72, %v861
    %v863 = vadd.f32 %v857, %v862
    %v864 = vxor.u32 %v863, 2147483648
    %v865 = vmul.f32 %v864, 1.442695
    %v866 = vpow.pop %v865
    %v867 = vadd.f32 %v866, 1.0
    %v868 = vrcp.pop %v867
    %v869 = vmul.f32 1.0, %v868
    %v870 = vmul.f32 %v26, %v853
    %v871 = vmul.f32 %v42, %v847
    %v872 = vadd.f32 %v870, %v871
    %v873 = vadd.f32 %v872, %v58
    %v874 = vlaneseq
    %v875 = vshrl.u32 %v874, 7
    %v876 = vsub.s32 1, %v875
    %v877 = vrot.slane %v849, %v876
    %v878 = vmul.f32 %v72, %v877
    %v879 = vadd.f32 %v873, %v878
    %v880 = vxor.u32 %v879, 2147483648
    %v881 = vmul.f32 %v880, 1.442695
    %v882 = vpow.pop %v881
    %v883 = vadd.f32 %v882, 1.0
    %v884 = vrcp.pop %v883
    %v885 = vmul.f32 1.0, %v884
    %v886 = vmul.f32 %v30, %v853
    %v887 = vmul.f32 %v46, %v847
    %v888 = vadd.f32 %v886, %v887
    %v889 = vadd.f32 %v888, %v62
    %v890 = vlaneseq
    %v891 = vshrl.u32 %v890, 7
    %v892 = vsub.s32 2, %v891
    %v893 = vrot.slane %v849, %v892
    %v894 = vmul.f32 %v72, %v893
    %v895 = vadd.f32 %v889, %v894
    %v896 = vtanh.pop %v895
    %v897 = vmul.f32 %v34, %v853
    %v898 = vmul.f32 %v50, %v847
    %v899 = vadd.f32 %v897, %v898
    %v900 = vadd.f32 %v899, %v66
    %v901 = vlaneseq
    %v902 = vshrl.u32 %v901, 7
    %v903 = vsub.s32 3, %v902
    %v904 = vrot.slane %v849, %v903
    %v905 = vmul.f32 %v72, %v904
    %v906 = vadd.f32 %v900, %v905
    %v907 = vxor.u32 %v906, 2147483648
    %v908 = vmul.f32 %v907, 1.442695
    %v909 = vpow.pop %v908
    %v910 = vadd.f32 %v909, 1.0
    %v911 = vrcp.pop %v910
    %v912 = vmul.f32 1.0, %v911
    %v913 = vmul.f32 %v885, %v848
    %v914 = vmul.f32 %v869, %v896
    %v915 = vadd.f32 %v913, %v914
    %v916 = vtanh.pop %v915
    %v917 = vmul.f32 %v912, %v916
    %vm918 = vcmp.le.s32.totalorder %v69, 2
    %v919 = vsub.s32 2, %v69
    %vm920 = vcmp.lt.s32.totalorder %v919, 8
    %vm921 = vmand %vm918, %vm920
    %v922 = vsel %vm921, 1, 0
    %vm923 = vcmp.eq.s32.totalorder %v922, 1
    %v924 = vsel %vm923, %v917, %v847
    %v925 = vsel %vm923, %v915, %v848
    %v926 = vld [vmem:[%s384] sm:$0xf]
    %v928 = vrot.slane %v924, 7
    %v930 = vsel %vm775, 0.0, %v928
    %v931 = vmul.f32 %v22, %v930
    %v932 = vmul.f32 %v38, %v924
    %v933 = vadd.f32 %v931, %v932
    %v934 = vadd.f32 %v933, %v54
    %v935 = vlaneseq
    %v936 = vshrl.u32 %v935, 7
    %v937 = vsub.s32 0, %v936
    %v938 = vrot.slane %v926, %v937
    %v939 = vmul.f32 %v72, %v938
    %v940 = vadd.f32 %v934, %v939
    %v941 = vxor.u32 %v940, 2147483648
    %v942 = vmul.f32 %v941, 1.442695
    %v943 = vpow.pop %v942
    %v944 = vadd.f32 %v943, 1.0
    %v945 = vrcp.pop %v944
    %v946 = vmul.f32 1.0, %v945
    %v947 = vmul.f32 %v26, %v930
    %v948 = vmul.f32 %v42, %v924
    %v949 = vadd.f32 %v947, %v948
    %v950 = vadd.f32 %v949, %v58
    %v951 = vlaneseq
    %v952 = vshrl.u32 %v951, 7
    %v953 = vsub.s32 1, %v952
    %v954 = vrot.slane %v926, %v953
    %v955 = vmul.f32 %v72, %v954
    %v956 = vadd.f32 %v950, %v955
    %v957 = vxor.u32 %v956, 2147483648
    %v958 = vmul.f32 %v957, 1.442695
    %v959 = vpow.pop %v958
    %v960 = vadd.f32 %v959, 1.0
    %v961 = vrcp.pop %v960
    %v962 = vmul.f32 1.0, %v961
    %v963 = vmul.f32 %v30, %v930
    %v964 = vmul.f32 %v46, %v924
    %v965 = vadd.f32 %v963, %v964
    %v966 = vadd.f32 %v965, %v62
    %v967 = vlaneseq
    %v968 = vshrl.u32 %v967, 7
    %v969 = vsub.s32 2, %v968
    %v970 = vrot.slane %v926, %v969
    %v971 = vmul.f32 %v72, %v970
    %v972 = vadd.f32 %v966, %v971
    %v973 = vtanh.pop %v972
    %v974 = vmul.f32 %v34, %v930
    %v975 = vmul.f32 %v50, %v924
    %v976 = vadd.f32 %v974, %v975
    %v977 = vadd.f32 %v976, %v66
    %v978 = vlaneseq
    %v979 = vshrl.u32 %v978, 7
    %v980 = vsub.s32 3, %v979
    %v981 = vrot.slane %v926, %v980
    %v982 = vmul.f32 %v72, %v981
    %v983 = vadd.f32 %v977, %v982
    %v984 = vxor.u32 %v983, 2147483648
    %v985 = vmul.f32 %v984, 1.442695
    %v986 = vpow.pop %v985
    %v987 = vadd.f32 %v986, 1.0
    %v988 = vrcp.pop %v987
    %v989 = vmul.f32 1.0, %v988
    %v990 = vmul.f32 %v962, %v925
    %v991 = vmul.f32 %v946, %v973
    %v992 = vadd.f32 %v990, %v991
    %v993 = vtanh.pop %v992
    %v994 = vmul.f32 %v989, %v993
    %vm995 = vcmp.le.s32.totalorder %v69, 3
    %v996 = vsub.s32 3, %v69
    %vm997 = vcmp.lt.s32.totalorder %v996, 8
    %vm998 = vmand %vm995, %vm997
    %v999 = vsel %vm998, 1, 0
    %vm1000 = vcmp.eq.s32.totalorder %v999, 1
    %v1001 = vsel %vm1000, %v994, %v924
    %v1002 = vsel %vm1000, %v992, %v925
    %v1003 = vld [vmem:[%s462] sm:$0xf]
    %v1005 = vrot.slane %v1001, 7
    %v1007 = vsel %vm775, 0.0, %v1005
    %v1008 = vmul.f32 %v22, %v1007
    %v1009 = vmul.f32 %v38, %v1001
    %v1010 = vadd.f32 %v1008, %v1009
    %v1011 = vadd.f32 %v1010, %v54
    %v1012 = vlaneseq
    %v1013 = vshrl.u32 %v1012, 7
    %v1014 = vsub.s32 0, %v1013
    %v1015 = vrot.slane %v1003, %v1014
    %v1016 = vmul.f32 %v72, %v1015
    %v1017 = vadd.f32 %v1011, %v1016
    %v1018 = vxor.u32 %v1017, 2147483648
    %v1019 = vmul.f32 %v1018, 1.442695
    %v1020 = vpow.pop %v1019
    %v1021 = vadd.f32 %v1020, 1.0
    %v1022 = vrcp.pop %v1021
    %v1023 = vmul.f32 1.0, %v1022
    %v1024 = vmul.f32 %v26, %v1007
    %v1025 = vmul.f32 %v42, %v1001
    %v1026 = vadd.f32 %v1024, %v1025
    %v1027 = vadd.f32 %v1026, %v58
    %v1028 = vlaneseq
    %v1029 = vshrl.u32 %v1028, 7
    %v1030 = vsub.s32 1, %v1029
    %v1031 = vrot.slane %v1003, %v1030
    %v1032 = vmul.f32 %v72, %v1031
    %v1033 = vadd.f32 %v1027, %v1032
    %v1034 = vxor.u32 %v1033, 2147483648
    %v1035 = vmul.f32 %v1034, 1.442695
    %v1036 = vpow.pop %v1035
    %v1037 = vadd.f32 %v1036, 1.0
    %v1038 = vrcp.pop %v1037
    %v1039 = vmul.f32 1.0, %v1038
    %v1040 = vmul.f32 %v30, %v1007
    %v1041 = vmul.f32 %v46, %v1001
    %v1042 = vadd.f32 %v1040, %v1041
    %v1043 = vadd.f32 %v1042, %v62
    %v1044 = vlaneseq
    %v1045 = vshrl.u32 %v1044, 7
    %v1046 = vsub.s32 2, %v1045
    %v1047 = vrot.slane %v1003, %v1046
    %v1048 = vmul.f32 %v72, %v1047
    %v1049 = vadd.f32 %v1043, %v1048
    %v1050 = vtanh.pop %v1049
    %v1051 = vmul.f32 %v34, %v1007
    %v1052 = vmul.f32 %v50, %v1001
    %v1053 = vadd.f32 %v1051, %v1052
    %v1054 = vadd.f32 %v1053, %v66
    %v1055 = vlaneseq
    %v1056 = vshrl.u32 %v1055, 7
    %v1057 = vsub.s32 3, %v1056
    %v1058 = vrot.slane %v1003, %v1057
    %v1059 = vmul.f32 %v72, %v1058
    %v1060 = vadd.f32 %v1054, %v1059
    %v1061 = vxor.u32 %v1060, 2147483648
    %v1062 = vmul.f32 %v1061, 1.442695
    %v1063 = vpow.pop %v1062
    %v1064 = vadd.f32 %v1063, 1.0
    %v1065 = vrcp.pop %v1064
    %v1066 = vmul.f32 1.0, %v1065
    %v1067 = vmul.f32 %v1039, %v1002
    %v1068 = vmul.f32 %v1023, %v1050
    %v1069 = vadd.f32 %v1067, %v1068
    %v1070 = vtanh.pop %v1069
    %v1071 = vmul.f32 %v1066, %v1070
    %vm1072 = vcmp.le.s32.totalorder %v69, 4
    %v1073 = vsub.s32 4, %v69
    %vm1074 = vcmp.lt.s32.totalorder %v1073, 8
    %vm1075 = vmand %vm1072, %vm1074
    %v1076 = vsel %vm1075, 1, 0
    %vm1077 = vcmp.eq.s32.totalorder %v1076, 1
    %v1078 = vsel %vm1077, %v1071, %v1001
    %v1079 = vsel %vm1077, %v1069, %v1002
    %v1080 = vld [vmem:[%s540] sm:$0xf]
    %v1082 = vrot.slane %v1078, 7
    %v1084 = vsel %vm775, 0.0, %v1082
    %v1085 = vmul.f32 %v22, %v1084
    %v1086 = vmul.f32 %v38, %v1078
    %v1087 = vadd.f32 %v1085, %v1086
    %v1088 = vadd.f32 %v1087, %v54
    %v1089 = vlaneseq
    %v1090 = vshrl.u32 %v1089, 7
    %v1091 = vsub.s32 0, %v1090
    %v1092 = vrot.slane %v1080, %v1091
    %v1093 = vmul.f32 %v72, %v1092
    %v1094 = vadd.f32 %v1088, %v1093
    %v1095 = vxor.u32 %v1094, 2147483648
    %v1096 = vmul.f32 %v1095, 1.442695
    %v1097 = vpow.pop %v1096
    %v1098 = vadd.f32 %v1097, 1.0
    %v1099 = vrcp.pop %v1098
    %v1100 = vmul.f32 1.0, %v1099
    %v1101 = vmul.f32 %v26, %v1084
    %v1102 = vmul.f32 %v42, %v1078
    %v1103 = vadd.f32 %v1101, %v1102
    %v1104 = vadd.f32 %v1103, %v58
    %v1105 = vlaneseq
    %v1106 = vshrl.u32 %v1105, 7
    %v1107 = vsub.s32 1, %v1106
    %v1108 = vrot.slane %v1080, %v1107
    %v1109 = vmul.f32 %v72, %v1108
    %v1110 = vadd.f32 %v1104, %v1109
    %v1111 = vxor.u32 %v1110, 2147483648
    %v1112 = vmul.f32 %v1111, 1.442695
    %v1113 = vpow.pop %v1112
    %v1114 = vadd.f32 %v1113, 1.0
    %v1115 = vrcp.pop %v1114
    %v1116 = vmul.f32 1.0, %v1115
    %v1117 = vmul.f32 %v30, %v1084
    %v1118 = vmul.f32 %v46, %v1078
    %v1119 = vadd.f32 %v1117, %v1118
    %v1120 = vadd.f32 %v1119, %v62
    %v1121 = vlaneseq
    %v1122 = vshrl.u32 %v1121, 7
    %v1123 = vsub.s32 2, %v1122
    %v1124 = vrot.slane %v1080, %v1123
    %v1125 = vmul.f32 %v72, %v1124
    %v1126 = vadd.f32 %v1120, %v1125
    %v1127 = vtanh.pop %v1126
    %v1128 = vmul.f32 %v34, %v1084
    %v1129 = vmul.f32 %v50, %v1078
    %v1130 = vadd.f32 %v1128, %v1129
    %v1131 = vadd.f32 %v1130, %v66
    %v1132 = vlaneseq
    %v1133 = vshrl.u32 %v1132, 7
    %v1134 = vsub.s32 3, %v1133
    %v1135 = vrot.slane %v1080, %v1134
    %v1136 = vmul.f32 %v72, %v1135
    %v1137 = vadd.f32 %v1131, %v1136
    %v1138 = vxor.u32 %v1137, 2147483648
    %v1139 = vmul.f32 %v1138, 1.442695
    %v1140 = vpow.pop %v1139
    %v1141 = vadd.f32 %v1140, 1.0
    %v1142 = vrcp.pop %v1141
    %v1143 = vmul.f32 1.0, %v1142
    %v1144 = vmul.f32 %v1116, %v1079
    %v1145 = vmul.f32 %v1100, %v1127
    %v1146 = vadd.f32 %v1144, %v1145
    %v1147 = vtanh.pop %v1146
    %v1148 = vmul.f32 %v1143, %v1147
    %vm1149 = vcmp.le.s32.totalorder %v69, 5
    %v1150 = vsub.s32 5, %v69
    %vm1151 = vcmp.lt.s32.totalorder %v1150, 8
    %vm1152 = vmand %vm1149, %vm1151
    %v1153 = vsel %vm1152, 1, 0
    %vm1154 = vcmp.eq.s32.totalorder %v1153, 1
    %v1155 = vsel %vm1154, %v1148, %v1078
    %v1156 = vsel %vm1154, %v1146, %v1079
    %v1157 = vld [vmem:[%s618] sm:$0xf]
    %v1159 = vrot.slane %v1155, 7
    %v1161 = vsel %vm775, 0.0, %v1159
    %v1162 = vmul.f32 %v22, %v1161
    %v1163 = vmul.f32 %v38, %v1155
    %v1164 = vadd.f32 %v1162, %v1163
    %v1165 = vadd.f32 %v1164, %v54
    %v1166 = vlaneseq
    %v1167 = vshrl.u32 %v1166, 7
    %v1168 = vsub.s32 0, %v1167
    %v1169 = vrot.slane %v1157, %v1168
    %v1170 = vmul.f32 %v72, %v1169
    %v1171 = vadd.f32 %v1165, %v1170
    %v1172 = vxor.u32 %v1171, 2147483648
    %v1173 = vmul.f32 %v1172, 1.442695
    %v1174 = vpow.pop %v1173
    %v1175 = vadd.f32 %v1174, 1.0
    %v1176 = vrcp.pop %v1175
    %v1177 = vmul.f32 1.0, %v1176
    %v1178 = vmul.f32 %v26, %v1161
    %v1179 = vmul.f32 %v42, %v1155
    %v1180 = vadd.f32 %v1178, %v1179
    %v1181 = vadd.f32 %v1180, %v58
    %v1182 = vlaneseq
    %v1183 = vshrl.u32 %v1182, 7
    %v1184 = vsub.s32 1, %v1183
    %v1185 = vrot.slane %v1157, %v1184
    %v1186 = vmul.f32 %v72, %v1185
    %v1187 = vadd.f32 %v1181, %v1186
    %v1188 = vxor.u32 %v1187, 2147483648
    %v1189 = vmul.f32 %v1188, 1.442695
    %v1190 = vpow.pop %v1189
    %v1191 = vadd.f32 %v1190, 1.0
    %v1192 = vrcp.pop %v1191
    %v1193 = vmul.f32 1.0, %v1192
    %v1194 = vmul.f32 %v30, %v1161
    %v1195 = vmul.f32 %v46, %v1155
    %v1196 = vadd.f32 %v1194, %v1195
    %v1197 = vadd.f32 %v1196, %v62
    %v1198 = vlaneseq
    %v1199 = vshrl.u32 %v1198, 7
    %v1200 = vsub.s32 2, %v1199
    %v1201 = vrot.slane %v1157, %v1200
    %v1202 = vmul.f32 %v72, %v1201
    %v1203 = vadd.f32 %v1197, %v1202
    %v1204 = vtanh.pop %v1203
    %v1205 = vmul.f32 %v34, %v1161
    %v1206 = vmul.f32 %v50, %v1155
    %v1207 = vadd.f32 %v1205, %v1206
    %v1208 = vadd.f32 %v1207, %v66
    %v1209 = vlaneseq
    %v1210 = vshrl.u32 %v1209, 7
    %v1211 = vsub.s32 3, %v1210
    %v1212 = vrot.slane %v1157, %v1211
    %v1213 = vmul.f32 %v72, %v1212
    %v1214 = vadd.f32 %v1208, %v1213
    %v1215 = vxor.u32 %v1214, 2147483648
    %v1216 = vmul.f32 %v1215, 1.442695
    %v1217 = vpow.pop %v1216
    %v1218 = vadd.f32 %v1217, 1.0
    %v1219 = vrcp.pop %v1218
    %v1220 = vmul.f32 1.0, %v1219
    %v1221 = vmul.f32 %v1193, %v1156
    %v1222 = vmul.f32 %v1177, %v1204
    %v1223 = vadd.f32 %v1221, %v1222
    %v1224 = vtanh.pop %v1223
    %v1225 = vmul.f32 %v1220, %v1224
    %vm1226 = vcmp.le.s32.totalorder %v69, 6
    %v1227 = vsub.s32 6, %v69
    %vm1228 = vcmp.lt.s32.totalorder %v1227, 8
    %vm1229 = vmand %vm1226, %vm1228
    %v1230 = vsel %vm1229, 1, 0
    %vm1231 = vcmp.eq.s32.totalorder %v1230, 1
    %v1232 = vsel %vm1231, %v1225, %v1155
    %v1233 = vsel %vm1231, %v1223, %v1156
    %v1234 = vld [vmem:[%s696] sm:$0xf]
    %v1236 = vrot.slane %v1232, 7
    %v1238 = vsel %vm775, 0.0, %v1236
    %v1239 = vmul.f32 %v22, %v1238
    %v1240 = vmul.f32 %v38, %v1232
    %v1241 = vadd.f32 %v1239, %v1240
    %v1242 = vadd.f32 %v1241, %v54
    %v1243 = vlaneseq
    %v1244 = vshrl.u32 %v1243, 7
    %v1245 = vsub.s32 0, %v1244
    %v1246 = vrot.slane %v1234, %v1245
    %v1247 = vmul.f32 %v72, %v1246
    %v1248 = vadd.f32 %v1242, %v1247
    %v1249 = vxor.u32 %v1248, 2147483648
    %v1250 = vmul.f32 %v1249, 1.442695
    %v1251 = vpow.pop %v1250
    %v1252 = vadd.f32 %v1251, 1.0
    %v1253 = vrcp.pop %v1252
    %v1254 = vmul.f32 1.0, %v1253
    %v1255 = vmul.f32 %v26, %v1238
    %v1256 = vmul.f32 %v42, %v1232
    %v1257 = vadd.f32 %v1255, %v1256
    %v1258 = vadd.f32 %v1257, %v58
    %v1259 = vlaneseq
    %v1260 = vshrl.u32 %v1259, 7
    %v1261 = vsub.s32 1, %v1260
    %v1262 = vrot.slane %v1234, %v1261
    %v1263 = vmul.f32 %v72, %v1262
    %v1264 = vadd.f32 %v1258, %v1263
    %v1265 = vxor.u32 %v1264, 2147483648
    %v1266 = vmul.f32 %v1265, 1.442695
    %v1267 = vpow.pop %v1266
    %v1268 = vadd.f32 %v1267, 1.0
    %v1269 = vrcp.pop %v1268
    %v1270 = vmul.f32 1.0, %v1269
    %v1271 = vmul.f32 %v30, %v1238
    %v1272 = vmul.f32 %v46, %v1232
    %v1273 = vadd.f32 %v1271, %v1272
    %v1274 = vadd.f32 %v1273, %v62
    %v1275 = vlaneseq
    %v1276 = vshrl.u32 %v1275, 7
    %v1277 = vsub.s32 2, %v1276
    %v1278 = vrot.slane %v1234, %v1277
    %v1279 = vmul.f32 %v72, %v1278
    %v1280 = vadd.f32 %v1274, %v1279
    %v1281 = vtanh.pop %v1280
    %v1282 = vmul.f32 %v34, %v1238
    %v1283 = vmul.f32 %v50, %v1232
    %v1284 = vadd.f32 %v1282, %v1283
    %v1285 = vadd.f32 %v1284, %v66
    %v1286 = vlaneseq
    %v1287 = vshrl.u32 %v1286, 7
    %v1288 = vsub.s32 3, %v1287
    %v1289 = vrot.slane %v1234, %v1288
    %v1290 = vmul.f32 %v72, %v1289
    %v1291 = vadd.f32 %v1285, %v1290
    %v1292 = vxor.u32 %v1291, 2147483648
    %v1293 = vmul.f32 %v1292, 1.442695
    %v1294 = vpow.pop %v1293
    %v1295 = vadd.f32 %v1294, 1.0
    %v1296 = vrcp.pop %v1295
    %v1297 = vmul.f32 1.0, %v1296
    %v1298 = vmul.f32 %v1270, %v1233
    %v1299 = vmul.f32 %v1254, %v1281
    %v1300 = vadd.f32 %v1298, %v1299
    %v1301 = vtanh.pop %v1300
    %v1302 = vmul.f32 %v1297, %v1301
    %vm1303 = vcmp.le.s32.totalorder %v69, 7
    %v1304 = vsub.s32 7, %v69
    %vm1305 = vcmp.lt.s32.totalorder %v1304, 8
    %vm1306 = vmand %vm1303, %vm1305
    %v1307 = vsel %vm1306, 1, 0
    %vm1308 = vcmp.eq.s32.totalorder %v1307, 1
    %v1309 = vsel %vm1308, %v1302, %v1232
    %v1310 = vsel %vm1308, %v1300, %v1233
    %v1312 = vrot.slane %v1309, 7
    %v1314 = vsel %vm775, 0.0, %v1312
    %v1315 = vmul.f32 %v22, %v1314
    %v1316 = vmul.f32 %v38, %v1309
    %v1317 = vadd.f32 %v1315, %v1316
    %v1318 = vadd.f32 %v1317, %v54
    %v1319 = vadd.f32 %v1318, %v1247
    %v1320 = vxor.u32 %v1319, 2147483648
    %v1321 = vmul.f32 %v1320, 1.442695
    %v1322 = vpow.pop %v1321
    %v1323 = vadd.f32 %v1322, 1.0
    %v1324 = vrcp.pop %v1323
    %v1325 = vmul.f32 1.0, %v1324
    %v1326 = vmul.f32 %v26, %v1314
    %v1327 = vmul.f32 %v42, %v1309
    %v1328 = vadd.f32 %v1326, %v1327
    %v1329 = vadd.f32 %v1328, %v58
    %v1330 = vadd.f32 %v1329, %v1263
    %v1331 = vxor.u32 %v1330, 2147483648
    %v1332 = vmul.f32 %v1331, 1.442695
    %v1333 = vpow.pop %v1332
    %v1334 = vadd.f32 %v1333, 1.0
    %v1335 = vrcp.pop %v1334
    %v1336 = vmul.f32 1.0, %v1335
    %v1337 = vmul.f32 %v30, %v1314
    %v1338 = vmul.f32 %v46, %v1309
    %v1339 = vadd.f32 %v1337, %v1338
    %v1340 = vadd.f32 %v1339, %v62
    %v1341 = vadd.f32 %v1340, %v1279
    %v1342 = vtanh.pop %v1341
    %v1343 = vmul.f32 %v34, %v1314
    %v1344 = vmul.f32 %v50, %v1309
    %v1345 = vadd.f32 %v1343, %v1344
    %v1346 = vadd.f32 %v1345, %v66
    %v1347 = vadd.f32 %v1346, %v1290
    %v1348 = vxor.u32 %v1347, 2147483648
    %v1349 = vmul.f32 %v1348, 1.442695
    %v1350 = vpow.pop %v1349
    %v1351 = vadd.f32 %v1350, 1.0
    %v1352 = vrcp.pop %v1351
    %v1353 = vmul.f32 1.0, %v1352
    %v1354 = vmul.f32 %v1336, %v1310
    %v1355 = vmul.f32 %v1325, %v1342
    %v1356 = vadd.f32 %v1354, %v1355
    %v1357 = vtanh.pop %v1356
    %v1358 = vmul.f32 %v1353, %v1357
    %vm1359 = vcmp.le.s32.totalorder %v69, 8
    %v1360 = vsub.s32 8, %v69
    %vm1361 = vcmp.lt.s32.totalorder %v1360, 8
    %vm1362 = vmand %vm1359, %vm1361
    %v1363 = vsel %vm1362, 1, 0
    %vm1364 = vcmp.eq.s32.totalorder %v1363, 1
    %v1365 = vsel %vm1364, %v1358, %v1309
    %v1366 = vsel %vm1364, %v1356, %v1310
    %v1368 = vrot.slane %v1365, 7
    %v1370 = vsel %vm775, 0.0, %v1368
    %v1371 = vmul.f32 %v22, %v1370
    %v1372 = vmul.f32 %v38, %v1365
    %v1373 = vadd.f32 %v1371, %v1372
    %v1374 = vadd.f32 %v1373, %v54
    %v1375 = vadd.f32 %v1374, %v1247
    %v1376 = vxor.u32 %v1375, 2147483648
    %v1377 = vmul.f32 %v1376, 1.442695
    %v1378 = vpow.pop %v1377
    %v1379 = vadd.f32 %v1378, 1.0
    %v1380 = vrcp.pop %v1379
    %v1381 = vmul.f32 1.0, %v1380
    %v1382 = vmul.f32 %v26, %v1370
    %v1383 = vmul.f32 %v42, %v1365
    %v1384 = vadd.f32 %v1382, %v1383
    %v1385 = vadd.f32 %v1384, %v58
    %v1386 = vadd.f32 %v1385, %v1263
    %v1387 = vxor.u32 %v1386, 2147483648
    %v1388 = vmul.f32 %v1387, 1.442695
    %v1389 = vpow.pop %v1388
    %v1390 = vadd.f32 %v1389, 1.0
    %v1391 = vrcp.pop %v1390
    %v1392 = vmul.f32 1.0, %v1391
    %v1393 = vmul.f32 %v30, %v1370
    %v1394 = vmul.f32 %v46, %v1365
    %v1395 = vadd.f32 %v1393, %v1394
    %v1396 = vadd.f32 %v1395, %v62
    %v1397 = vadd.f32 %v1396, %v1279
    %v1398 = vtanh.pop %v1397
    %v1399 = vmul.f32 %v34, %v1370
    %v1400 = vmul.f32 %v50, %v1365
    %v1401 = vadd.f32 %v1399, %v1400
    %v1402 = vadd.f32 %v1401, %v66
    %v1403 = vadd.f32 %v1402, %v1290
    %v1404 = vxor.u32 %v1403, 2147483648
    %v1405 = vmul.f32 %v1404, 1.442695
    %v1406 = vpow.pop %v1405
    %v1407 = vadd.f32 %v1406, 1.0
    %v1408 = vrcp.pop %v1407
    %v1409 = vmul.f32 1.0, %v1408
    %v1410 = vmul.f32 %v1392, %v1366
    %v1411 = vmul.f32 %v1381, %v1398
    %v1412 = vadd.f32 %v1410, %v1411
    %v1413 = vtanh.pop %v1412
    %v1414 = vmul.f32 %v1409, %v1413
    %vm1415 = vcmp.le.s32.totalorder %v69, 9
    %v1416 = vsub.s32 9, %v69
    %vm1417 = vcmp.lt.s32.totalorder %v1416, 8
    %vm1418 = vmand %vm1415, %vm1417
    %v1419 = vsel %vm1418, 1, 0
    %vm1420 = vcmp.eq.s32.totalorder %v1419, 1
    %v1421 = vsel %vm1420, %v1414, %v1365
    %v1422 = vsel %vm1420, %v1412, %v1366
    %v1424 = vrot.slane %v1421, 7
    %v1426 = vsel %vm775, 0.0, %v1424
    %v1427 = vmul.f32 %v22, %v1426
    %v1428 = vmul.f32 %v38, %v1421
    %v1429 = vadd.f32 %v1427, %v1428
    %v1430 = vadd.f32 %v1429, %v54
    %v1431 = vadd.f32 %v1430, %v1247
    %v1432 = vxor.u32 %v1431, 2147483648
    %v1433 = vmul.f32 %v1432, 1.442695
    %v1434 = vpow.pop %v1433
    %v1435 = vadd.f32 %v1434, 1.0
    %v1436 = vrcp.pop %v1435
    %v1437 = vmul.f32 1.0, %v1436
    %v1438 = vmul.f32 %v26, %v1426
    %v1439 = vmul.f32 %v42, %v1421
    %v1440 = vadd.f32 %v1438, %v1439
    %v1441 = vadd.f32 %v1440, %v58
    %v1442 = vadd.f32 %v1441, %v1263
    %v1443 = vxor.u32 %v1442, 2147483648
    %v1444 = vmul.f32 %v1443, 1.442695
    %v1445 = vpow.pop %v1444
    %v1446 = vadd.f32 %v1445, 1.0
    %v1447 = vrcp.pop %v1446
    %v1448 = vmul.f32 1.0, %v1447
    %v1449 = vmul.f32 %v30, %v1426
    %v1450 = vmul.f32 %v46, %v1421
    %v1451 = vadd.f32 %v1449, %v1450
    %v1452 = vadd.f32 %v1451, %v62
    %v1453 = vadd.f32 %v1452, %v1279
    %v1454 = vtanh.pop %v1453
    %v1455 = vmul.f32 %v34, %v1426
    %v1456 = vmul.f32 %v50, %v1421
    %v1457 = vadd.f32 %v1455, %v1456
    %v1458 = vadd.f32 %v1457, %v66
    %v1459 = vadd.f32 %v1458, %v1290
    %v1460 = vxor.u32 %v1459, 2147483648
    %v1461 = vmul.f32 %v1460, 1.442695
    %v1462 = vpow.pop %v1461
    %v1463 = vadd.f32 %v1462, 1.0
    %v1464 = vrcp.pop %v1463
    %v1465 = vmul.f32 1.0, %v1464
    %v1466 = vmul.f32 %v1448, %v1422
    %v1467 = vmul.f32 %v1437, %v1454
    %v1468 = vadd.f32 %v1466, %v1467
    %v1469 = vtanh.pop %v1468
    %v1470 = vmul.f32 %v1465, %v1469
    %vm1471 = vcmp.le.s32.totalorder %v69, 10
    %v1472 = vsub.s32 10, %v69
    %vm1473 = vcmp.lt.s32.totalorder %v1472, 8
    %vm1474 = vmand %vm1471, %vm1473
    %v1475 = vsel %vm1474, 1, 0
    %vm1476 = vcmp.eq.s32.totalorder %v1475, 1
    %v1477 = vsel %vm1476, %v1470, %v1421
    %v1478 = vsel %vm1476, %v1468, %v1422
    %v1480 = vrot.slane %v1477, 7
    %v1482 = vsel %vm775, 0.0, %v1480
    %v1483 = vmul.f32 %v22, %v1482
    %v1484 = vmul.f32 %v38, %v1477
    %v1485 = vadd.f32 %v1483, %v1484
    %v1486 = vadd.f32 %v1485, %v54
    %v1487 = vadd.f32 %v1486, %v1247
    %v1488 = vxor.u32 %v1487, 2147483648
    %v1489 = vmul.f32 %v1488, 1.442695
    %v1490 = vpow.pop %v1489
    %v1491 = vadd.f32 %v1490, 1.0
    %v1492 = vrcp.pop %v1491
    %v1493 = vmul.f32 1.0, %v1492
    %v1494 = vmul.f32 %v26, %v1482
    %v1495 = vmul.f32 %v42, %v1477
    %v1496 = vadd.f32 %v1494, %v1495
    %v1497 = vadd.f32 %v1496, %v58
    %v1498 = vadd.f32 %v1497, %v1263
    %v1499 = vxor.u32 %v1498, 2147483648
    %v1500 = vmul.f32 %v1499, 1.442695
    %v1501 = vpow.pop %v1500
    %v1502 = vadd.f32 %v1501, 1.0
    %v1503 = vrcp.pop %v1502
    %v1504 = vmul.f32 1.0, %v1503
    %v1505 = vmul.f32 %v30, %v1482
    %v1506 = vmul.f32 %v46, %v1477
    %v1507 = vadd.f32 %v1505, %v1506
    %v1508 = vadd.f32 %v1507, %v62
    %v1509 = vadd.f32 %v1508, %v1279
    %v1510 = vtanh.pop %v1509
    %v1511 = vmul.f32 %v34, %v1482
    %v1512 = vmul.f32 %v50, %v1477
    %v1513 = vadd.f32 %v1511, %v1512
    %v1514 = vadd.f32 %v1513, %v66
    %v1515 = vadd.f32 %v1514, %v1290
    %v1516 = vxor.u32 %v1515, 2147483648
    %v1517 = vmul.f32 %v1516, 1.442695
    %v1518 = vpow.pop %v1517
    %v1519 = vadd.f32 %v1518, 1.0
    %v1520 = vrcp.pop %v1519
    %v1521 = vmul.f32 1.0, %v1520
    %v1522 = vmul.f32 %v1504, %v1478
    %v1523 = vmul.f32 %v1493, %v1510
    %v1524 = vadd.f32 %v1522, %v1523
    %v1525 = vtanh.pop %v1524
    %v1526 = vmul.f32 %v1521, %v1525
    %vm1527 = vcmp.le.s32.totalorder %v69, 11
    %v1528 = vsub.s32 11, %v69
    %vm1529 = vcmp.lt.s32.totalorder %v1528, 8
    %vm1530 = vmand %vm1527, %vm1529
    %v1531 = vsel %vm1530, 1, 0
    %vm1532 = vcmp.eq.s32.totalorder %v1531, 1
    %v1533 = vsel %vm1532, %v1526, %v1477
    %v1534 = vsel %vm1532, %v1524, %v1478
    %v1536 = vrot.slane %v1533, 7
    %v1538 = vsel %vm775, 0.0, %v1536
    %v1539 = vmul.f32 %v22, %v1538
    %v1540 = vmul.f32 %v38, %v1533
    %v1541 = vadd.f32 %v1539, %v1540
    %v1542 = vadd.f32 %v1541, %v54
    %v1543 = vadd.f32 %v1542, %v1247
    %v1544 = vxor.u32 %v1543, 2147483648
    %v1545 = vmul.f32 %v1544, 1.442695
    %v1546 = vpow.pop %v1545
    %v1547 = vadd.f32 %v1546, 1.0
    %v1548 = vrcp.pop %v1547
    %v1549 = vmul.f32 1.0, %v1548
    %v1550 = vmul.f32 %v26, %v1538
    %v1551 = vmul.f32 %v42, %v1533
    %v1552 = vadd.f32 %v1550, %v1551
    %v1553 = vadd.f32 %v1552, %v58
    %v1554 = vadd.f32 %v1553, %v1263
    %v1555 = vxor.u32 %v1554, 2147483648
    %v1556 = vmul.f32 %v1555, 1.442695
    %v1557 = vpow.pop %v1556
    %v1558 = vadd.f32 %v1557, 1.0
    %v1559 = vrcp.pop %v1558
    %v1560 = vmul.f32 1.0, %v1559
    %v1561 = vmul.f32 %v30, %v1538
    %v1562 = vmul.f32 %v46, %v1533
    %v1563 = vadd.f32 %v1561, %v1562
    %v1564 = vadd.f32 %v1563, %v62
    %v1565 = vadd.f32 %v1564, %v1279
    %v1566 = vtanh.pop %v1565
    %v1567 = vmul.f32 %v34, %v1538
    %v1568 = vmul.f32 %v50, %v1533
    %v1569 = vadd.f32 %v1567, %v1568
    %v1570 = vadd.f32 %v1569, %v66
    %v1571 = vadd.f32 %v1570, %v1290
    %v1572 = vxor.u32 %v1571, 2147483648
    %v1573 = vmul.f32 %v1572, 1.442695
    %v1574 = vpow.pop %v1573
    %v1575 = vadd.f32 %v1574, 1.0
    %v1576 = vrcp.pop %v1575
    %v1577 = vmul.f32 1.0, %v1576
    %v1578 = vmul.f32 %v1560, %v1534
    %v1579 = vmul.f32 %v1549, %v1566
    %v1580 = vadd.f32 %v1578, %v1579
    %v1581 = vtanh.pop %v1580
    %v1582 = vmul.f32 %v1577, %v1581
    %vm1583 = vcmp.le.s32.totalorder %v69, 12
    %v1584 = vsub.s32 12, %v69
    %vm1585 = vcmp.lt.s32.totalorder %v1584, 8
    %vm1586 = vmand %vm1583, %vm1585
    %v1587 = vsel %vm1586, 1, 0
    %vm1588 = vcmp.eq.s32.totalorder %v1587, 1
    %v1589 = vsel %vm1588, %v1582, %v1533
    %vm1590 = vcmask 13317
    %1591 = vst.msk [vmem:[#allocation3 - $0x5] sm:$0x20] %vm1590, %v1589
    // Predicated region
    $region10: #{model04_forward.1} parent=1 // pred_check
      _
    $region11: #{model04_forward.1} parent=1 // pred_check_branch
      %1593 = sbr.rel (0) target = $region13
    $region12: #{model04_forward.1} parent=1 // pred_region
      %s1595 = ssub.s32 16, 16
      %1596 = vsyncadd [#allocation4], %s1595
      %s1598 = sshll.u32 [#allocation3], 4
      %s1599 = int_to_ptr.vmem [resolvable:$true] %s1598
      %1601 = dma.vmem_to_hbm [thread:$0]  %s1599, 16, %s2, [#allocation4]
    $region13: #{model04_forward.1} parent=1 // pred_fallthru
      _
    // Predicated region
    $region14: #{model04_forward.1} parent=1 // pred_check
      _
    $region15: #{model04_forward.1} parent=1 // pred_check_branch
      %1603 = sbr.rel (0) target = $region17
    $region16: #{model04_forward.1} parent=1 // pred_region
      %1604 = dma.done [#allocation4], 16
    $region17: #{model04_forward.1} parent=1 // pred_fallthru
      _
    %1605 = vsyncpa [#allocation4], 1

</llo_original>
